<compile_context>
chip_gen: v7x
topology: tpu7x:2x2x1
jax: 0.10.0
libtpu: 0.0.40
codegen_flags: <defaults>
</compile_context>

<pallas_src>
import jax
import jax.numpy as jnp
from jax import lax
from jax.experimental import pallas as pl
from jax.experimental.pallas import tpu as pltpu


# ----------------------------------------------------------------------------
# Fused kernel: per (batch-tile, time-chunk) grid step
#   1) gi_chunk = x_chunk @ W_ih^T + (b_ih + b_hr + b_hz)   (one MXU GEMM)
#   2) serial GRU recurrence over the chunk (bounded-unroll fori_loop)
#   3) on the last chunk: out = sel_h @ W2^T + b2           (fused Linear)
# ----------------------------------------------------------------------------
def gru_fused_kernel(x_ref, len_ref, wih_ref, bi_ref, whh_ref, bhn_ref,
                     w2_ref, b2_ref, o_ref, gi_sc, h_sc, sel_sc):
    ti = pl.program_id(1)
    n_t = pl.num_programs(1)
    Bt, Hp = h_sc.shape
    Tc = x_ref.shape[0] // Bt

    @pl.when(ti == 0)
    def _init():
        h_sc[...] = jnp.zeros_like(h_sc)
        sel_sc[...] = jnp.zeros_like(sel_sc)

    # ---- hoisted input projection for this time chunk (gi stays in VMEM) ----
    gi_sc[...] = (jnp.dot(x_ref[...], wih_ref[...],
                          preferred_element_type=jnp.float32) + bi_ref[...])

    whh = whh_ref[...]          # (Hp, 3Hp) loaded once per grid step
    bhn = bhn_ref[...]          # (1, Hp)   b_hn stays inside the reset-gated term
    lengths = len_ref[...]      # (Bt, 1) int32; padded rows are 0 -> never selected
    t0 = ti * Tc

    def step(t, carry):
        h, sel = carry
        row = pl.multiple_of(t * Bt, 8)              # Bt is a multiple of 8
        gi_t = gi_sc[pl.ds(row, Bt), :]              # (Bt, 3Hp) contiguous load
        gh = jnp.dot(h, whh, preferred_element_type=jnp.float32)
        # gate slabs are lane-aligned (Hp multiple of 128) -> free views
        r = jax.nn.sigmoid(gi_t[:, :Hp] + gh[:, :Hp])
        z = jax.nn.sigmoid(gi_t[:, Hp:2 * Hp] + gh[:, Hp:2 * Hp])
        n = jnp.tanh(gi_t[:, 2 * Hp:] + r * (gh[:, 2 * Hp:] + bhn))
        h_new = (1.0 - z) * n + z * h
        # keep the hidden state at global step t == length-1 (single select)
        sel = jnp.where(lengths == t0 + t + 1, h_new, sel)
        return h_new, sel

    h_new, sel_new = lax.fori_loop(0, Tc, step, (h_sc[...], sel_sc[...]),
                                   unroll=min(8, Tc))
    h_sc[...] = h_new
    sel_sc[...] = sel_new

    @pl.when(ti == n_t - 1)
    def _finalize():
        # fused final Linear: (Bt, Hp) @ (Hp, Cp) + b2 -> lane-dense store
        o_ref[...] = (jnp.dot(sel_new, w2_ref[...],
                              preferred_element_type=jnp.float32) + b2_ref[...])


# ----------------------------------------------------------------------------
# Padding helpers (wrapper-side, run once)
# ----------------------------------------------------------------------------
def _round_up(n, m):
    return ((n + m - 1) // m) * m


def _pad_axis(a, axis, new_size):
    pad = new_size - a.shape[axis]
    if pad == 0:
        return a
    widths = [(0, 0)] * a.ndim
    widths[axis] = (0, pad)
    return jnp.pad(a, widths)


def _pad_gates(w, H, Hp):
    """Zero-pad the concatenated [r|z|n] gate axis per gate: (..., 3H) -> (..., 3Hp)."""
    lead = w.shape[:-1]
    w3 = w.reshape(*lead, 3, H)
    w3 = _pad_axis(w3, w3.ndim - 1, Hp)
    return w3.reshape(*lead, 3 * Hp)


# ----------------------------------------------------------------------------
# Full forward (matches UnimodalRegressorSequence.forward, eval mode)
# ----------------------------------------------------------------------------
def unimodal_regressor_sequence(seq, lengths, params, *,
                                batch_tile=None, time_chunk=None):
    """seq: (B, T, F) batch-first float32, lengths: (B,) int32 with 1 <= len <= T."""
    B, T, F = seq.shape
    H = params["w_hh_t"].shape[0]
    C = params["w2_t"].shape[1]

    Hp = _round_up(max(H, 128), 128)    # lane-aligned gate slabs
    Cp = _round_up(max(C, 128), 128)    # lane-dense output store

    # Batch tile: fill the MXU M dimension before sharding across grid steps.
    Bp = _round_up(max(B, 8), 8)
    Bt = (Bp if Bp <= 256 else 256) if batch_tile is None else _round_up(batch_tile, 8)
    Bp = _round_up(Bp, Bt)
    nB = Bp // Bt

    # Time chunk: size the streamed x block + in-kernel gi scratch against an
    # explicit VMEM budget (fits v5e's 16 MiB scoped default and v7x's 64 MiB
    # physical with headroom for the weights / h / sel / output blocks).
    if time_chunk is None:
        budget = 8 << 20
        per_step = (2 * Bt * F + Bt * 3 * Hp) * 4
        Tc = max(1, min(T, budget // per_step))
        if Tc > 8:
            Tc = (Tc // 8) * 8
    else:
        Tc = max(1, min(T, int(time_chunk)))
    nT = -(-T // Tc)
    Tp = nT * Tc

    # ---- pad parameters once (zero pads keep padded lanes exactly 0) ----
    w_ih_t = _pad_gates(params["w_ih_t"], H, Hp)                     # (F,  3Hp)
    w_hh_t = _pad_gates(_pad_axis(params["w_hh_t"], 0, Hp), H, Hp)   # (Hp, 3Hp)
    b_ih = _pad_gates(params["b_ih"], H, Hp)                         # (1,  3Hp)
    b_hh = _pad_gates(params["b_hh"], H, Hp)                         # (1,  3Hp)
    # Fold b_hr / b_hz into the input-projection bias; only b_hn must stay
    # inside the reset-gated term of the recurrence.
    b_comb = b_ih + b_hh.at[:, 2 * Hp:].set(0.0)                     # (1,  3Hp)
    b_hn = b_hh[:, 2 * Hp:]                                          # (1,  Hp)
    w2_t = _pad_axis(_pad_axis(params["w2_t"], 0, Hp), 1, Cp)        # (Hp, Cp)
    b2 = _pad_axis(params["b2"], 1, Cp)                              # (1,  Cp)

    # ---- time-major input, batch/time padded, batch-tile-major 2D layout ----
    x = jnp.transpose(seq, (1, 0, 2)).astype(jnp.float32)            # (T, B, F)
    x = _pad_axis(_pad_axis(x, 1, Bp), 0, Tp)                        # (Tp, Bp, F)
    x = (x.reshape(Tp, nB, Bt, F)
          .transpose(1, 0, 2, 3)
          .reshape(nB * Tp * Bt, F))                                 # (nB*Tp*Bt, F)
    len_col = _pad_axis(lengths.astype(jnp.int32), 0, Bp).reshape(Bp, 1)  # pads = 0

    # ---- explicit VMEM budget ----
    vmem_bytes = 4 * (2 * Tc * Bt * F                    # x (double buffered)
                      + Tc * Bt * 3 * Hp                 # gi scratch
                      + F * 3 * Hp + Hp * 3 * Hp + Hp * Cp   # weights
                      + 2 * Bt * Hp                      # h / sel scratch
                      + 2 * Bt * Cp                      # output block
                      + 8 * Hp)                          # biases
    vmem_limit = int(min(max(2 * vmem_bytes, 32 << 20), 48 << 20))

    grid_spec = pltpu.PrefetchScalarGridSpec(
        num_scalar_prefetch=0,
        grid=(nB, nT),
        in_specs=[
            pl.BlockSpec((Tc * Bt, F), lambda bi, ti: (bi * nT + ti, 0)),  # x chunk
            pl.BlockSpec((Bt, 1), lambda bi, ti: (bi, 0)),                 # lengths
            pl.BlockSpec((F, 3 * Hp), lambda bi, ti: (0, 0)),              # W_ih^T
            pl.BlockSpec((1, 3 * Hp), lambda bi, ti: (0, 0)),              # b_ih+b_hr/z
            pl.BlockSpec((Hp, 3 * Hp), lambda bi, ti: (0, 0)),             # W_hh^T
            pl.BlockSpec((1, Hp), lambda bi, ti: (0, 0)),                  # b_hn
            pl.BlockSpec((Hp, Cp), lambda bi, ti: (0, 0)),                 # W2^T
            pl.BlockSpec((1, Cp), lambda bi, ti: (0, 0)),                  # b2
        ],
        out_specs=pl.BlockSpec((Bt, Cp), lambda bi, ti: (bi, 0)),
        scratch_shapes=[
            pltpu.VMEM((Tc * Bt, 3 * Hp), jnp.float32),   # gi chunk
            pltpu.VMEM((Bt, Hp), jnp.float32),            # h (carried across chunks)
            pltpu.VMEM((Bt, Hp), jnp.float32),            # selected h at t=len-1
        ],
    )

    out_pad = pl.pallas_call(
        gru_fused_kernel,
        out_shape=jax.ShapeDtypeStruct((Bp, Cp), jnp.float32),
        grid_spec=grid_spec,
        compiler_params=pltpu.CompilerParams(
            dimension_semantics=("parallel", "arbitrary"),
            vmem_limit_bytes=vmem_limit),
    )(x, len_col, w_ih_t, b_comb, w_hh_t, b_hn, w2_t, b2)

    return out_pad[:B, :C]


# ----------------------------------------------------------------------------
# Pure-JAX reference (lax.scan GRU) for correctness check
# ----------------------------------------------------------------------------
def reference(seq, lengths, params):
    B, T, F = seq.shape
    H = params["w_hh_t"].shape[0]

    def step(h, x_t):
        gi = x_t @ params["w_ih_t"] + params["b_ih"]
        gh = h @ params["w_hh_t"] + params["b_hh"]
        r = jax.nn.sigmoid(gi[:, :H] + gh[:, :H])
        z = jax.nn.sigmoid(gi[:, H:2 * H] + gh[:, H:2 * H])
        n = jnp.tanh(gi[:, 2 * H:] + r * gh[:, 2 * H:])
        h_new = (1.0 - z) * n + z * h
        return h_new, h_new

    h0 = jnp.zeros((B, H), jnp.float32)
    _, hs = jax.lax.scan(step, h0, jnp.transpose(seq, (1, 0, 2)))   # (T, B, H)
    h_last = hs[lengths - 1, jnp.arange(B)]                          # (B, H)
    return h_last @ params["w2_t"] + params["b2"]


if __name__ == "__main__":
    # Small config: feature_dim=32, rnn_layer_dim=hidden_layer_dim=32,
    # class_num=4, rnn_layer_num=1, bidirectional=False.
    B, T, F, H, C = 4, 8, 32, 32, 4

    key = jax.random.PRNGKey(0)
    ks = jax.random.split(key, 8)
    k = 1.0 / float(H) ** 0.5
    params = {
        "w_ih_t": jax.random.uniform(ks[0], (F, 3 * H), jnp.float32, -k, k),
        "w_hh_t": jax.random.uniform(ks[1], (H, 3 * H), jnp.float32, -k, k),
        "b_ih":   jax.random.uniform(ks[2], (1, 3 * H), jnp.float32, -k, k),
        "b_hh":   jax.random.uniform(ks[3], (1, 3 * H), jnp.float32, -k, k),
        "w2_t":   jax.random.uniform(ks[4], (H, C), jnp.float32, -k, k),
        "b2":     jax.random.uniform(ks[5], (1, C), jnp.float32, -k, k),
    }

    # --- test 1: demo size, single batch tile, single time chunk ---
    seq = jax.random.normal(ks[6], (B, T, F), jnp.float32)
    lengths = jnp.array([8, 5, 3, 7], dtype=jnp.int32)
    y = jax.block_until_ready(unimodal_regressor_sequence(seq, lengths, params))
    y_ref = reference(seq, lengths, params)
    assert y.shape == (B, C)
    assert jnp.allclose(y, y_ref, atol=1e-4, rtol=1e-4), "mismatch vs JAX reference (1)"

    # --- test 2: exercise batch-tile grid axis + multi-chunk time streaming
    #     (cross-chunk hidden-state carry, time padding) ---
    B2, T2 = 10, 12
    seq2 = jax.random.normal(ks[7], (B2, T2, F), jnp.float32)
    lengths2 = jnp.array([12, 7, 3, 9, 1, 12, 5, 8, 11, 2], dtype=jnp.int32)
    y2 = jax.block_until_ready(
        unimodal_regressor_sequence(seq2, lengths2, params,
                                    batch_tile=8, time_chunk=5))
    y2_ref = reference(seq2, lengths2, params)
    assert y2.shape == (B2, C)
    assert jnp.allclose(y2, y2_ref, atol=1e-4, rtol=1e-4), "mismatch vs JAX reference (2)"

    print("KERNEL_OK")
</pallas_src>

<mosaic_0001>
module attributes {stable_mosaic.version = 11 : i64} {
  func.func @gru_fused_kernel(%arg0: i32, %arg1: i32, %arg2: memref<64x32xf32, #tpu.memory_space<vmem>>, %arg3: memref<8x1xi32, #tpu.memory_space<vmem>>, %arg4: memref<32x384xf32, #tpu.memory_space<vmem>>, %arg5: memref<1x384xf32, #tpu.memory_space<vmem>>, %arg6: memref<128x384xf32, #tpu.memory_space<vmem>>, %arg7: memref<1x128xf32, #tpu.memory_space<vmem>>, %arg8: memref<128x128xf32, #tpu.memory_space<vmem>>, %arg9: memref<1x128xf32, #tpu.memory_space<vmem>>, %arg10: memref<8x128xf32, #tpu.memory_space<vmem>>, %arg11: memref<64x384xf32, #tpu.memory_space<vmem>>, %arg12: memref<8x128xf32, #tpu.memory_space<vmem>>, %arg13: memref<8x128xf32, #tpu.memory_space<vmem>>) attributes {dimension_semantics = [#tpu.dimension_semantics<parallel>, #tpu.dimension_semantics<arbitrary>], iteration_bounds = array<i64: 1, 1>, scalar_prefetch = 0 : i64, scratch_operands = 3 : i64, tpu.core_type = #tpu.core_type<tc>, window_params = [{transform_indices = @transform_0, window_bounds = array<i64: 64, 32>}, {transform_indices = @transform_1, window_bounds = array<i64: 8, 1>}, {pipeline_mode = #tpu.pipeline_mode<synchronous>, transform_indices = @transform_2, window_bounds = array<i64: 32, 384>}, {pipeline_mode = #tpu.pipeline_mode<synchronous>, transform_indices = @transform_3, window_bounds = array<i64: 1, 384>}, {pipeline_mode = #tpu.pipeline_mode<synchronous>, transform_indices = @transform_4, window_bounds = array<i64: 128, 384>}, {pipeline_mode = #tpu.pipeline_mode<synchronous>, transform_indices = @transform_5, window_bounds = array<i64: 1, 128>}, {pipeline_mode = #tpu.pipeline_mode<synchronous>, transform_indices = @transform_6, window_bounds = array<i64: 128, 128>}, {pipeline_mode = #tpu.pipeline_mode<synchronous>, transform_indices = @transform_7, window_bounds = array<i64: 1, 128>}, {transform_indices = @transform_8, window_bounds = array<i64: 8, 128>}]} {
    %c0_i32 = arith.constant 0 : i32
    %0 = arith.cmpi eq, %arg1, %c0_i32 : i32
    %1 = arith.extui %0 : i1 to i32
    %c0_i32_0 = arith.constant 0 : i32
    %2 = arith.cmpi ne, %1, %c0_i32_0 : i32
    scf.if %2 {
      %cst_82 = arith.constant 0.000000e+00 : f32
      %341 = vector.broadcast %cst_82 : f32 to vector<8x128xf32>
      %c0_83 = arith.constant 0 : index
      %c0_84 = arith.constant 0 : index
      %342 = vector.load %arg12[%c0_83, %c0_84] : memref<8x128xf32, #tpu.memory_space<vmem>>, vector<8x128xf32>
      tpu.vector_store %arg12[%c0_83, %c0_84], %341 {strides = array<i32>} : memref<8x128xf32, #tpu.memory_space<vmem>>, vector<8x128xf32>,
      %cst_85 = arith.constant 0.000000e+00 : f32
      %343 = vector.broadcast %cst_85 : f32 to vector<8x128xf32>
      %c0_86 = arith.constant 0 : index
      %c0_87 = arith.constant 0 : index
      %344 = vector.load %arg13[%c0_86, %c0_87] : memref<8x128xf32, #tpu.memory_space<vmem>>, vector<8x128xf32>
      tpu.vector_store %arg13[%c0_86, %c0_87], %343 {strides = array<i32>} : memref<8x128xf32, #tpu.memory_space<vmem>>, vector<8x128xf32>,
    } else {
    }
    %c0 = arith.constant 0 : index
    %c0_1 = arith.constant 0 : index
    %3 = vector.load %arg2[%c0, %c0_1] : memref<64x32xf32, #tpu.memory_space<vmem>>, vector<64x32xf32>
    %c0_2 = arith.constant 0 : index
    %c0_3 = arith.constant 0 : index
    %4 = vector.load %arg4[%c0_2, %c0_3] : memref<32x384xf32, #tpu.memory_space<vmem>>, vector<32x384xf32>
    %cst = arith.constant dense<0.000000e+00> : vector<64x384xf32>
    %5 = tpu.matmul %3, %4, %cst {dimension_numbers = #tpu.dot_dimension_numbers<[1], [0], [0], [1], [0, 0, 1, 1], [], []>} : vector<64x32xf32>, vector<32x384xf32>, vector<64x384xf32> -> vector<64x384xf32>
    %c0_4 = arith.constant 0 : index
    %c0_5 = arith.constant 0 : index
    %6 = vector.load %arg5[%c0_4, %c0_5] : memref<1x384xf32, #tpu.memory_space<vmem>>, vector<1x384xf32>
    %7 = vector.broadcast %6 : vector<1x384xf32> to vector<64x384xf32>
    %8 = arith.addf %5, %7 : vector<64x384xf32>
    %c0_6 = arith.constant 0 : index
    %c0_7 = arith.constant 0 : index
    %9 = vector.load %arg11[%c0_6, %c0_7] : memref<64x384xf32, #tpu.memory_space<vmem>>, vector<64x384xf32>
    tpu.vector_store %arg11[%c0_6, %c0_7], %8 {strides = array<i32>} : memref<64x384xf32, #tpu.memory_space<vmem>>, vector<64x384xf32>,
    %c0_8 = arith.constant 0 : index
    %c0_9 = arith.constant 0 : index
    %10 = vector.load %arg6[%c0_8, %c0_9] : memref<128x384xf32, #tpu.memory_space<vmem>>, vector<128x384xf32>
    %c0_10 = arith.constant 0 : index
    %c0_11 = arith.constant 0 : index
    %11 = vector.load %arg7[%c0_10, %c0_11] : memref<1x128xf32, #tpu.memory_space<vmem>>, vector<1x128xf32>
    %c0_12 = arith.constant 0 : index
    %c0_13 = arith.constant 0 : index
    %12 = vector.load %arg3[%c0_12, %c0_13] : memref<8x1xi32, #tpu.memory_space<vmem>>, vector<8x1xi32>
    %c8_i32 = arith.constant 8 : i32
    %13 = arith.muli %arg1, %c8_i32 : i32
    %c0_14 = arith.constant 0 : index
    %c0_15 = arith.constant 0 : index
    %14 = vector.load %arg12[%c0_14, %c0_15] : memref<8x128xf32, #tpu.memory_space<vmem>>, vector<8x128xf32>
    %c0_16 = arith.constant 0 : index
    %c0_17 = arith.constant 0 : index
    %15 = vector.load %arg13[%c0_16, %c0_17] : memref<8x128xf32, #tpu.memory_space<vmem>>, vector<8x128xf32>
    %c0_i32_18 = arith.constant 0 : i32
    %c8_i32_19 = arith.constant 8 : i32
    %16 = arith.muli %c0_i32_18, %c8_i32_19 : i32
    %17 = tpu.assume_multiple %16, 8 : i32
    %18 = arith.index_cast %17 : i32 to index
    %c0_20 = arith.constant 0 : index
    %19 = vector.load %arg11[%18, %c0_20] : memref<64x384xf32, #tpu.memory_space<vmem>>, vector<8x384xf32>
    %cst_21 = arith.constant dense<0.000000e+00> : vector<8x384xf32>
    %20 = tpu.matmul %14, %10, %cst_21 {dimension_numbers = #tpu.dot_dimension_numbers<[1], [0], [0], [1], [0, 0, 1, 1], [], []>} : vector<8x128xf32>, vector<128x384xf32>, vector<8x384xf32> -> vector<8x384xf32>
    %21 = vector.extract_strided_slice %19 {offsets = [0, 0], sizes = [8, 128], strides = [1, 1]} : vector<8x384xf32> to vector<8x128xf32>
    %22 = vector.extract_strided_slice %20 {offsets = [0, 0], sizes = [8, 128], strides = [1, 1]} : vector<8x384xf32> to vector<8x128xf32>
    %23 = arith.addf %21, %22 : vector<8x128xf32>
    %24 = arith.negf %23 : vector<8x128xf32>
    %25 = math.exp %24 : vector<8x128xf32>
    %cst_22 = arith.constant 1.000000e+00 : f32
    %26 = vector.broadcast %cst_22 : f32 to vector<8x128xf32>
    %27 = arith.addf %26, %25 : vector<8x128xf32>
    %28 = arith.divf %26, %27 : vector<8x128xf32>
    %29 = vector.extract_strided_slice %19 {offsets = [0, 128], sizes = [8, 128], strides = [1, 1]} : vector<8x384xf32> to vector<8x128xf32>
    %30 = vector.extract_strided_slice %20 {offsets = [0, 128], sizes = [8, 128], strides = [1, 1]} : vector<8x384xf32> to vector<8x128xf32>
    %31 = arith.addf %29, %30 : vector<8x128xf32>
    %32 = arith.negf %31 : vector<8x128xf32>
    %33 = math.exp %32 : vector<8x128xf32>
    %cst_23 = arith.constant 1.000000e+00 : f32
    %34 = vector.broadcast %cst_23 : f32 to vector<8x128xf32>
    %35 = arith.addf %34, %33 : vector<8x128xf32>
    %36 = arith.divf %34, %35 : vector<8x128xf32>
    %37 = vector.extract_strided_slice %19 {offsets = [0, 256], sizes = [8, 128], strides = [1, 1]} : vector<8x384xf32> to vector<8x128xf32>
    %38 = vector.extract_strided_slice %20 {offsets = [0, 256], sizes = [8, 128], strides = [1, 1]} : vector<8x384xf32> to vector<8x128xf32>
    %39 = vector.broadcast %11 : vector<1x128xf32> to vector<8x128xf32>
    %40 = arith.addf %38, %39 : vector<8x128xf32>
    %41 = arith.mulf %28, %40 : vector<8x128xf32>
    %42 = arith.addf %37, %41 : vector<8x128xf32>
    %43 = math.tanh %42 : vector<8x128xf32>
    %cst_24 = arith.constant 1.000000e+00 : f32
    %44 = vector.broadcast %cst_24 : f32 to vector<8x128xf32>
    %45 = arith.subf %44, %36 : vector<8x128xf32>
    %46 = arith.mulf %45, %43 : vector<8x128xf32>
    %47 = arith.mulf %36, %14 : vector<8x128xf32>
    %48 = arith.addf %46, %47 : vector<8x128xf32>
    %49 = arith.addi %13, %c0_i32_18 : i32
    %c1_i32 = arith.constant 1 : i32
    %50 = arith.addi %49, %c1_i32 : i32
    %51 = vector.broadcast %50 : i32 to vector<8x1xi32>
    %52 = arith.cmpi eq, %12, %51 : vector<8x1xi32>
    %53 = vector.shape_cast %52 : vector<8x1xi1> to vector<8x1xi1>
    %54 = vector.broadcast %53 : vector<8x1xi1> to vector<8x128xi1>
    %55 = arith.select %54, %48, %15 : vector<8x128xi1>, vector<8x128xf32>
    %c1_i32_25 = arith.constant 1 : i32
    %c8_i32_26 = arith.constant 8 : i32
    %56 = arith.muli %c1_i32_25, %c8_i32_26 : i32
    %57 = tpu.assume_multiple %56, 8 : i32
    %58 = arith.index_cast %57 : i32 to index
    %c0_27 = arith.constant 0 : index
    %59 = vector.load %arg11[%58, %c0_27] : memref<64x384xf32, #tpu.memory_space<vmem>>, vector<8x384xf32>
    %cst_28 = arith.constant dense<0.000000e+00> : vector<8x384xf32>
    %60 = tpu.matmul %48, %10, %cst_28 {dimension_numbers = #tpu.dot_dimension_numbers<[1], [0], [0], [1], [0, 0, 1, 1], [], []>} : vector<8x128xf32>, vector<128x384xf32>, vector<8x384xf32> -> vector<8x384xf32>
    %61 = vector.extract_strided_slice %59 {offsets = [0, 0], sizes = [8, 128], strides = [1, 1]} : vector<8x384xf32> to vector<8x128xf32>
    %62 = vector.extract_strided_slice %60 {offsets = [0, 0], sizes = [8, 128], strides = [1, 1]} : vector<8x384xf32> to vector<8x128xf32>
    %63 = arith.addf %61, %62 : vector<8x128xf32>
    %64 = arith.negf %63 : vector<8x128xf32>
    %65 = math.exp %64 : vector<8x128xf32>
    %cst_29 = arith.constant 1.000000e+00 : f32
    %66 = vector.broadcast %cst_29 : f32 to vector<8x128xf32>
    %67 = arith.addf %66, %65 : vector<8x128xf32>
    %68 = arith.divf %66, %67 : vector<8x128xf32>
    %69 = vector.extract_strided_slice %59 {offsets = [0, 128], sizes = [8, 128], strides = [1, 1]} : vector<8x384xf32> to vector<8x128xf32>
    %70 = vector.extract_strided_slice %60 {offsets = [0, 128], sizes = [8, 128], strides = [1, 1]} : vector<8x384xf32> to vector<8x128xf32>
    %71 = arith.addf %69, %70 : vector<8x128xf32>
    %72 = arith.negf %71 : vector<8x128xf32>
    %73 = math.exp %72 : vector<8x128xf32>
    %cst_30 = arith.constant 1.000000e+00 : f32
    %74 = vector.broadcast %cst_30 : f32 to vector<8x128xf32>
    %75 = arith.addf %74, %73 : vector<8x128xf32>
    %76 = arith.divf %74, %75 : vector<8x128xf32>
    %77 = vector.extract_strided_slice %59 {offsets = [0, 256], sizes = [8, 128], strides = [1, 1]} : vector<8x384xf32> to vector<8x128xf32>
    %78 = vector.extract_strided_slice %60 {offsets = [0, 256], sizes = [8, 128], strides = [1, 1]} : vector<8x384xf32> to vector<8x128xf32>
    %79 = vector.broadcast %11 : vector<1x128xf32> to vector<8x128xf32>
    %80 = arith.addf %78, %79 : vector<8x128xf32>
    %81 = arith.mulf %68, %80 : vector<8x128xf32>
    %82 = arith.addf %77, %81 : vector<8x128xf32>
    %83 = math.tanh %82 : vector<8x128xf32>
    %cst_31 = arith.constant 1.000000e+00 : f32
    %84 = vector.broadcast %cst_31 : f32 to vector<8x128xf32>
    %85 = arith.subf %84, %76 : vector<8x128xf32>
    %86 = arith.mulf %85, %83 : vector<8x128xf32>
    %87 = arith.mulf %76, %48 : vector<8x128xf32>
    %88 = arith.addf %86, %87 : vector<8x128xf32>
    %89 = arith.addi %13, %c1_i32_25 : i32
    %c1_i32_32 = arith.constant 1 : i32
    %90 = arith.addi %89, %c1_i32_32 : i32
    %91 = vector.broadcast %90 : i32 to vector<8x1xi32>
    %92 = arith.cmpi eq, %12, %91 : vector<8x1xi32>
    %93 = vector.shape_cast %92 : vector<8x1xi1> to vector<8x1xi1>
    %94 = vector.broadcast %93 : vector<8x1xi1> to vector<8x128xi1>
    %95 = arith.select %94, %88, %55 : vector<8x128xi1>, vector<8x128xf32>
    %c2_i32 = arith.constant 2 : i32
    %c8_i32_33 = arith.constant 8 : i32
    %96 = arith.muli %c2_i32, %c8_i32_33 : i32
    %97 = tpu.assume_multiple %96, 8 : i32
    %98 = arith.index_cast %97 : i32 to index
    %c0_34 = arith.constant 0 : index
    %99 = vector.load %arg11[%98, %c0_34] : memref<64x384xf32, #tpu.memory_space<vmem>>, vector<8x384xf32>
    %cst_35 = arith.constant dense<0.000000e+00> : vector<8x384xf32>
    %100 = tpu.matmul %88, %10, %cst_35 {dimension_numbers = #tpu.dot_dimension_numbers<[1], [0], [0], [1], [0, 0, 1, 1], [], []>} : vector<8x128xf32>, vector<128x384xf32>, vector<8x384xf32> -> vector<8x384xf32>
    %101 = vector.extract_strided_slice %99 {offsets = [0, 0], sizes = [8, 128], strides = [1, 1]} : vector<8x384xf32> to vector<8x128xf32>
    %102 = vector.extract_strided_slice %100 {offsets = [0, 0], sizes = [8, 128], strides = [1, 1]} : vector<8x384xf32> to vector<8x128xf32>
    %103 = arith.addf %101, %102 : vector<8x128xf32>
    %104 = arith.negf %103 : vector<8x128xf32>
    %105 = math.exp %104 : vector<8x128xf32>
    %cst_36 = arith.constant 1.000000e+00 : f32
    %106 = vector.broadcast %cst_36 : f32 to vector<8x128xf32>
    %107 = arith.addf %106, %105 : vector<8x128xf32>
    %108 = arith.divf %106, %107 : vector<8x128xf32>
    %109 = vector.extract_strided_slice %99 {offsets = [0, 128], sizes = [8, 128], strides = [1, 1]} : vector<8x384xf32> to vector<8x128xf32>
    %110 = vector.extract_strided_slice %100 {offsets = [0, 128], sizes = [8, 128], strides = [1, 1]} : vector<8x384xf32> to vector<8x128xf32>
    %111 = arith.addf %109, %110 : vector<8x128xf32>
    %112 = arith.negf %111 : vector<8x128xf32>
    %113 = math.exp %112 : vector<8x128xf32>
    %cst_37 = arith.constant 1.000000e+00 : f32
    %114 = vector.broadcast %cst_37 : f32 to vector<8x128xf32>
    %115 = arith.addf %114, %113 : vector<8x128xf32>
    %116 = arith.divf %114, %115 : vector<8x128xf32>
    %117 = vector.extract_strided_slice %99 {offsets = [0, 256], sizes = [8, 128], strides = [1, 1]} : vector<8x384xf32> to vector<8x128xf32>
    %118 = vector.extract_strided_slice %100 {offsets = [0, 256], sizes = [8, 128], strides = [1, 1]} : vector<8x384xf32> to vector<8x128xf32>
    %119 = vector.broadcast %11 : vector<1x128xf32> to vector<8x128xf32>
    %120 = arith.addf %118, %119 : vector<8x128xf32>
    %121 = arith.mulf %108, %120 : vector<8x128xf32>
    %122 = arith.addf %117, %121 : vector<8x128xf32>
    %123 = math.tanh %122 : vector<8x128xf32>
    %cst_38 = arith.constant 1.000000e+00 : f32
    %124 = vector.broadcast %cst_38 : f32 to vector<8x128xf32>
    %125 = arith.subf %124, %116 : vector<8x128xf32>
    %126 = arith.mulf %125, %123 : vector<8x128xf32>
    %127 = arith.mulf %116, %88 : vector<8x128xf32>
    %128 = arith.addf %126, %127 : vector<8x128xf32>
    %129 = arith.addi %13, %c2_i32 : i32
    %c1_i32_39 = arith.constant 1 : i32
    %130 = arith.addi %129, %c1_i32_39 : i32
    %131 = vector.broadcast %130 : i32 to vector<8x1xi32>
    %132 = arith.cmpi eq, %12, %131 : vector<8x1xi32>
    %133 = vector.shape_cast %132 : vector<8x1xi1> to vector<8x1xi1>
    %134 = vector.broadcast %133 : vector<8x1xi1> to vector<8x128xi1>
    %135 = arith.select %134, %128, %95 : vector<8x128xi1>, vector<8x128xf32>
    %c3_i32 = arith.constant 3 : i32
    %c8_i32_40 = arith.constant 8 : i32
    %136 = arith.muli %c3_i32, %c8_i32_40 : i32
    %137 = tpu.assume_multiple %136, 8 : i32
    %138 = arith.index_cast %137 : i32 to index
    %c0_41 = arith.constant 0 : index
    %139 = vector.load %arg11[%138, %c0_41] : memref<64x384xf32, #tpu.memory_space<vmem>>, vector<8x384xf32>
    %cst_42 = arith.constant dense<0.000000e+00> : vector<8x384xf32>
    %140 = tpu.matmul %128, %10, %cst_42 {dimension_numbers = #tpu.dot_dimension_numbers<[1], [0], [0], [1], [0, 0, 1, 1], [], []>} : vector<8x128xf32>, vector<128x384xf32>, vector<8x384xf32> -> vector<8x384xf32>
    %141 = vector.extract_strided_slice %139 {offsets = [0, 0], sizes = [8, 128], strides = [1, 1]} : vector<8x384xf32> to vector<8x128xf32>
    %142 = vector.extract_strided_slice %140 {offsets = [0, 0], sizes = [8, 128], strides = [1, 1]} : vector<8x384xf32> to vector<8x128xf32>
    %143 = arith.addf %141, %142 : vector<8x128xf32>
    %144 = arith.negf %143 : vector<8x128xf32>
    %145 = math.exp %144 : vector<8x128xf32>
    %cst_43 = arith.constant 1.000000e+00 : f32
    %146 = vector.broadcast %cst_43 : f32 to vector<8x128xf32>
    %147 = arith.addf %146, %145 : vector<8x128xf32>
    %148 = arith.divf %146, %147 : vector<8x128xf32>
    %149 = vector.extract_strided_slice %139 {offsets = [0, 128], sizes = [8, 128], strides = [1, 1]} : vector<8x384xf32> to vector<8x128xf32>
    %150 = vector.extract_strided_slice %140 {offsets = [0, 128], sizes = [8, 128], strides = [1, 1]} : vector<8x384xf32> to vector<8x128xf32>
    %151 = arith.addf %149, %150 : vector<8x128xf32>
    %152 = arith.negf %151 : vector<8x128xf32>
    %153 = math.exp %152 : vector<8x128xf32>
    %cst_44 = arith.constant 1.000000e+00 : f32
    %154 = vector.broadcast %cst_44 : f32 to vector<8x128xf32>
    %155 = arith.addf %154, %153 : vector<8x128xf32>
    %156 = arith.divf %154, %155 : vector<8x128xf32>
    %157 = vector.extract_strided_slice %139 {offsets = [0, 256], sizes = [8, 128], strides = [1, 1]} : vector<8x384xf32> to vector<8x128xf32>
    %158 = vector.extract_strided_slice %140 {offsets = [0, 256], sizes = [8, 128], strides = [1, 1]} : vector<8x384xf32> to vector<8x128xf32>
    %159 = vector.broadcast %11 : vector<1x128xf32> to vector<8x128xf32>
    %160 = arith.addf %158, %159 : vector<8x128xf32>
    %161 = arith.mulf %148, %160 : vector<8x128xf32>
    %162 = arith.addf %157, %161 : vector<8x128xf32>
    %163 = math.tanh %162 : vector<8x128xf32>
    %cst_45 = arith.constant 1.000000e+00 : f32
    %164 = vector.broadcast %cst_45 : f32 to vector<8x128xf32>
    %165 = arith.subf %164, %156 : vector<8x128xf32>
    %166 = arith.mulf %165, %163 : vector<8x128xf32>
    %167 = arith.mulf %156, %128 : vector<8x128xf32>
    %168 = arith.addf %166, %167 : vector<8x128xf32>
    %169 = arith.addi %13, %c3_i32 : i32
    %c1_i32_46 = arith.constant 1 : i32
    %170 = arith.addi %169, %c1_i32_46 : i32
    %171 = vector.broadcast %170 : i32 to vector<8x1xi32>
    %172 = arith.cmpi eq, %12, %171 : vector<8x1xi32>
    %173 = vector.shape_cast %172 : vector<8x1xi1> to vector<8x1xi1>
    %174 = vector.broadcast %173 : vector<8x1xi1> to vector<8x128xi1>
    %175 = arith.select %174, %168, %135 : vector<8x128xi1>, vector<8x128xf32>
    %c4_i32 = arith.constant 4 : i32
    %c8_i32_47 = arith.constant 8 : i32
    %176 = arith.muli %c4_i32, %c8_i32_47 : i32
    %177 = tpu.assume_multiple %176, 8 : i32
    %178 = arith.index_cast %177 : i32 to index
    %c0_48 = arith.constant 0 : index
    %179 = vector.load %arg11[%178, %c0_48] : memref<64x384xf32, #tpu.memory_space<vmem>>, vector<8x384xf32>
    %cst_49 = arith.constant dense<0.000000e+00> : vector<8x384xf32>
    %180 = tpu.matmul %168, %10, %cst_49 {dimension_numbers = #tpu.dot_dimension_numbers<[1], [0], [0], [1], [0, 0, 1, 1], [], []>} : vector<8x128xf32>, vector<128x384xf32>, vector<8x384xf32> -> vector<8x384xf32>
    %181 = vector.extract_strided_slice %179 {offsets = [0, 0], sizes = [8, 128], strides = [1, 1]} : vector<8x384xf32> to vector<8x128xf32>
    %182 = vector.extract_strided_slice %180 {offsets = [0, 0], sizes = [8, 128], strides = [1, 1]} : vector<8x384xf32> to vector<8x128xf32>
    %183 = arith.addf %181, %182 : vector<8x128xf32>
    %184 = arith.negf %183 : vector<8x128xf32>
    %185 = math.exp %184 : vector<8x128xf32>
    %cst_50 = arith.constant 1.000000e+00 : f32
    %186 = vector.broadcast %cst_50 : f32 to vector<8x128xf32>
    %187 = arith.addf %186, %185 : vector<8x128xf32>
    %188 = arith.divf %186, %187 : vector<8x128xf32>
    %189 = vector.extract_strided_slice %179 {offsets = [0, 128], sizes = [8, 128], strides = [1, 1]} : vector<8x384xf32> to vector<8x128xf32>
    %190 = vector.extract_strided_slice %180 {offsets = [0, 128], sizes = [8, 128], strides = [1, 1]} : vector<8x384xf32> to vector<8x128xf32>
    %191 = arith.addf %189, %190 : vector<8x128xf32>
    %192 = arith.negf %191 : vector<8x128xf32>
    %193 = math.exp %192 : vector<8x128xf32>
    %cst_51 = arith.constant 1.000000e+00 : f32
    %194 = vector.broadcast %cst_51 : f32 to vector<8x128xf32>
    %195 = arith.addf %194, %193 : vector<8x128xf32>
    %196 = arith.divf %194, %195 : vector<8x128xf32>
    %197 = vector.extract_strided_slice %179 {offsets = [0, 256], sizes = [8, 128], strides = [1, 1]} : vector<8x384xf32> to vector<8x128xf32>
    %198 = vector.extract_strided_slice %180 {offsets = [0, 256], sizes = [8, 128], strides = [1, 1]} : vector<8x384xf32> to vector<8x128xf32>
    %199 = vector.broadcast %11 : vector<1x128xf32> to vector<8x128xf32>
    %200 = arith.addf %198, %199 : vector<8x128xf32>
    %201 = arith.mulf %188, %200 : vector<8x128xf32>
    %202 = arith.addf %197, %201 : vector<8x128xf32>
    %203 = math.tanh %202 : vector<8x128xf32>
    %cst_52 = arith.constant 1.000000e+00 : f32
    %204 = vector.broadcast %cst_52 : f32 to vector<8x128xf32>
    %205 = arith.subf %204, %196 : vector<8x128xf32>
    %206 = arith.mulf %205, %203 : vector<8x128xf32>
    %207 = arith.mulf %196, %168 : vector<8x128xf32>
    %208 = arith.addf %206, %207 : vector<8x128xf32>
    %209 = arith.addi %13, %c4_i32 : i32
    %c1_i32_53 = arith.constant 1 : i32
    %210 = arith.addi %209, %c1_i32_53 : i32
    %211 = vector.broadcast %210 : i32 to vector<8x1xi32>
    %212 = arith.cmpi eq, %12, %211 : vector<8x1xi32>
    %213 = vector.shape_cast %212 : vector<8x1xi1> to vector<8x1xi1>
    %214 = vector.broadcast %213 : vector<8x1xi1> to vector<8x128xi1>
    %215 = arith.select %214, %208, %175 : vector<8x128xi1>, vector<8x128xf32>
    %c5_i32 = arith.constant 5 : i32
    %c8_i32_54 = arith.constant 8 : i32
    %216 = arith.muli %c5_i32, %c8_i32_54 : i32
    %217 = tpu.assume_multiple %216, 8 : i32
    %218 = arith.index_cast %217 : i32 to index
    %c0_55 = arith.constant 0 : index
    %219 = vector.load %arg11[%218, %c0_55] : memref<64x384xf32, #tpu.memory_space<vmem>>, vector<8x384xf32>
    %cst_56 = arith.constant dense<0.000000e+00> : vector<8x384xf32>
    %220 = tpu.matmul %208, %10, %cst_56 {dimension_numbers = #tpu.dot_dimension_numbers<[1], [0], [0], [1], [0, 0, 1, 1], [], []>} : vector<8x128xf32>, vector<128x384xf32>, vector<8x384xf32> -> vector<8x384xf32>
    %221 = vector.extract_strided_slice %219 {offsets = [0, 0], sizes = [8, 128], strides = [1, 1]} : vector<8x384xf32> to vector<8x128xf32>
    %222 = vector.extract_strided_slice %220 {offsets = [0, 0], sizes = [8, 128], strides = [1, 1]} : vector<8x384xf32> to vector<8x128xf32>
    %223 = arith.addf %221, %222 : vector<8x128xf32>
    %224 = arith.negf %223 : vector<8x128xf32>
    %225 = math.exp %224 : vector<8x128xf32>
    %cst_57 = arith.constant 1.000000e+00 : f32
    %226 = vector.broadcast %cst_57 : f32 to vector<8x128xf32>
    %227 = arith.addf %226, %225 : vector<8x128xf32>
    %228 = arith.divf %226, %227 : vector<8x128xf32>
    %229 = vector.extract_strided_slice %219 {offsets = [0, 128], sizes = [8, 128], strides = [1, 1]} : vector<8x384xf32> to vector<8x128xf32>
    %230 = vector.extract_strided_slice %220 {offsets = [0, 128], sizes = [8, 128], strides = [1, 1]} : vector<8x384xf32> to vector<8x128xf32>
    %231 = arith.addf %229, %230 : vector<8x128xf32>
    %232 = arith.negf %231 : vector<8x128xf32>
    %233 = math.exp %232 : vector<8x128xf32>
    %cst_58 = arith.constant 1.000000e+00 : f32
    %234 = vector.broadcast %cst_58 : f32 to vector<8x128xf32>
    %235 = arith.addf %234, %233 : vector<8x128xf32>
    %236 = arith.divf %234, %235 : vector<8x128xf32>
    %237 = vector.extract_strided_slice %219 {offsets = [0, 256], sizes = [8, 128], strides = [1, 1]} : vector<8x384xf32> to vector<8x128xf32>
    %238 = vector.extract_strided_slice %220 {offsets = [0, 256], sizes = [8, 128], strides = [1, 1]} : vector<8x384xf32> to vector<8x128xf32>
    %239 = vector.broadcast %11 : vector<1x128xf32> to vector<8x128xf32>
    %240 = arith.addf %238, %239 : vector<8x128xf32>
    %241 = arith.mulf %228, %240 : vector<8x128xf32>
    %242 = arith.addf %237, %241 : vector<8x128xf32>
    %243 = math.tanh %242 : vector<8x128xf32>
    %cst_59 = arith.constant 1.000000e+00 : f32
    %244 = vector.broadcast %cst_59 : f32 to vector<8x128xf32>
    %245 = arith.subf %244, %236 : vector<8x128xf32>
    %246 = arith.mulf %245, %243 : vector<8x128xf32>
    %247 = arith.mulf %236, %208 : vector<8x128xf32>
    %248 = arith.addf %246, %247 : vector<8x128xf32>
    %249 = arith.addi %13, %c5_i32 : i32
    %c1_i32_60 = arith.constant 1 : i32
    %250 = arith.addi %249, %c1_i32_60 : i32
    %251 = vector.broadcast %250 : i32 to vector<8x1xi32>
    %252 = arith.cmpi eq, %12, %251 : vector<8x1xi32>
    %253 = vector.shape_cast %252 : vector<8x1xi1> to vector<8x1xi1>
    %254 = vector.broadcast %253 : vector<8x1xi1> to vector<8x128xi1>
    %255 = arith.select %254, %248, %215 : vector<8x128xi1>, vector<8x128xf32>
    %c6_i32 = arith.constant 6 : i32
    %c8_i32_61 = arith.constant 8 : i32
    %256 = arith.muli %c6_i32, %c8_i32_61 : i32
    %257 = tpu.assume_multiple %256, 8 : i32
    %258 = arith.index_cast %257 : i32 to index
    %c0_62 = arith.constant 0 : index
    %259 = vector.load %arg11[%258, %c0_62] : memref<64x384xf32, #tpu.memory_space<vmem>>, vector<8x384xf32>
    %cst_63 = arith.constant dense<0.000000e+00> : vector<8x384xf32>
    %260 = tpu.matmul %248, %10, %cst_63 {dimension_numbers = #tpu.dot_dimension_numbers<[1], [0], [0], [1], [0, 0, 1, 1], [], []>} : vector<8x128xf32>, vector<128x384xf32>, vector<8x384xf32> -> vector<8x384xf32>
    %261 = vector.extract_strided_slice %259 {offsets = [0, 0], sizes = [8, 128], strides = [1, 1]} : vector<8x384xf32> to vector<8x128xf32>
    %262 = vector.extract_strided_slice %260 {offsets = [0, 0], sizes = [8, 128], strides = [1, 1]} : vector<8x384xf32> to vector<8x128xf32>
    %263 = arith.addf %261, %262 : vector<8x128xf32>
    %264 = arith.negf %263 : vector<8x128xf32>
    %265 = math.exp %264 : vector<8x128xf32>
    %cst_64 = arith.constant 1.000000e+00 : f32
    %266 = vector.broadcast %cst_64 : f32 to vector<8x128xf32>
    %267 = arith.addf %266, %265 : vector<8x128xf32>
    %268 = arith.divf %266, %267 : vector<8x128xf32>
    %269 = vector.extract_strided_slice %259 {offsets = [0, 128], sizes = [8, 128], strides = [1, 1]} : vector<8x384xf32> to vector<8x128xf32>
    %270 = vector.extract_strided_slice %260 {offsets = [0, 128], sizes = [8, 128], strides = [1, 1]} : vector<8x384xf32> to vector<8x128xf32>
    %271 = arith.addf %269, %270 : vector<8x128xf32>
    %272 = arith.negf %271 : vector<8x128xf32>
    %273 = math.exp %272 : vector<8x128xf32>
    %cst_65 = arith.constant 1.000000e+00 : f32
    %274 = vector.broadcast %cst_65 : f32 to vector<8x128xf32>
    %275 = arith.addf %274, %273 : vector<8x128xf32>
    %276 = arith.divf %274, %275 : vector<8x128xf32>
    %277 = vector.extract_strided_slice %259 {offsets = [0, 256], sizes = [8, 128], strides = [1, 1]} : vector<8x384xf32> to vector<8x128xf32>
    %278 = vector.extract_strided_slice %260 {offsets = [0, 256], sizes = [8, 128], strides = [1, 1]} : vector<8x384xf32> to vector<8x128xf32>
    %279 = vector.broadcast %11 : vector<1x128xf32> to vector<8x128xf32>
    %280 = arith.addf %278, %279 : vector<8x128xf32>
    %281 = arith.mulf %268, %280 : vector<8x128xf32>
    %282 = arith.addf %277, %281 : vector<8x128xf32>
    %283 = math.tanh %282 : vector<8x128xf32>
    %cst_66 = arith.constant 1.000000e+00 : f32
    %284 = vector.broadcast %cst_66 : f32 to vector<8x128xf32>
    %285 = arith.subf %284, %276 : vector<8x128xf32>
    %286 = arith.mulf %285, %283 : vector<8x128xf32>
    %287 = arith.mulf %276, %248 : vector<8x128xf32>
    %288 = arith.addf %286, %287 : vector<8x128xf32>
    %289 = arith.addi %13, %c6_i32 : i32
    %c1_i32_67 = arith.constant 1 : i32
    %290 = arith.addi %289, %c1_i32_67 : i32
    %291 = vector.broadcast %290 : i32 to vector<8x1xi32>
    %292 = arith.cmpi eq, %12, %291 : vector<8x1xi32>
    %293 = vector.shape_cast %292 : vector<8x1xi1> to vector<8x1xi1>
    %294 = vector.broadcast %293 : vector<8x1xi1> to vector<8x128xi1>
    %295 = arith.select %294, %288, %255 : vector<8x128xi1>, vector<8x128xf32>
    %c7_i32 = arith.constant 7 : i32
    %c8_i32_68 = arith.constant 8 : i32
    %296 = arith.muli %c7_i32, %c8_i32_68 : i32
    %297 = tpu.assume_multiple %296, 8 : i32
    %298 = arith.index_cast %297 : i32 to index
    %c0_69 = arith.constant 0 : index
    %299 = vector.load %arg11[%298, %c0_69] : memref<64x384xf32, #tpu.memory_space<vmem>>, vector<8x384xf32>
    %cst_70 = arith.constant dense<0.000000e+00> : vector<8x384xf32>
    %300 = tpu.matmul %288, %10, %cst_70 {dimension_numbers = #tpu.dot_dimension_numbers<[1], [0], [0], [1], [0, 0, 1, 1], [], []>} : vector<8x128xf32>, vector<128x384xf32>, vector<8x384xf32> -> vector<8x384xf32>
    %301 = vector.extract_strided_slice %299 {offsets = [0, 0], sizes = [8, 128], strides = [1, 1]} : vector<8x384xf32> to vector<8x128xf32>
    %302 = vector.extract_strided_slice %300 {offsets = [0, 0], sizes = [8, 128], strides = [1, 1]} : vector<8x384xf32> to vector<8x128xf32>
    %303 = arith.addf %301, %302 : vector<8x128xf32>
    %304 = arith.negf %303 : vector<8x128xf32>
    %305 = math.exp %304 : vector<8x128xf32>
    %cst_71 = arith.constant 1.000000e+00 : f32
    %306 = vector.broadcast %cst_71 : f32 to vector<8x128xf32>
    %307 = arith.addf %306, %305 : vector<8x128xf32>
    %308 = arith.divf %306, %307 : vector<8x128xf32>
    %309 = vector.extract_strided_slice %299 {offsets = [0, 128], sizes = [8, 128], strides = [1, 1]} : vector<8x384xf32> to vector<8x128xf32>
    %310 = vector.extract_strided_slice %300 {offsets = [0, 128], sizes = [8, 128], strides = [1, 1]} : vector<8x384xf32> to vector<8x128xf32>
    %311 = arith.addf %309, %310 : vector<8x128xf32>
    %312 = arith.negf %311 : vector<8x128xf32>
    %313 = math.exp %312 : vector<8x128xf32>
    %cst_72 = arith.constant 1.000000e+00 : f32
    %314 = vector.broadcast %cst_72 : f32 to vector<8x128xf32>
    %315 = arith.addf %314, %313 : vector<8x128xf32>
    %316 = arith.divf %314, %315 : vector<8x128xf32>
    %317 = vector.extract_strided_slice %299 {offsets = [0, 256], sizes = [8, 128], strides = [1, 1]} : vector<8x384xf32> to vector<8x128xf32>
    %318 = vector.extract_strided_slice %300 {offsets = [0, 256], sizes = [8, 128], strides = [1, 1]} : vector<8x384xf32> to vector<8x128xf32>
    %319 = vector.broadcast %11 : vector<1x128xf32> to vector<8x128xf32>
    %320 = arith.addf %318, %319 : vector<8x128xf32>
    %321 = arith.mulf %308, %320 : vector<8x128xf32>
    %322 = arith.addf %317, %321 : vector<8x128xf32>
    %323 = math.tanh %322 : vector<8x128xf32>
    %cst_73 = arith.constant 1.000000e+00 : f32
    %324 = vector.broadcast %cst_73 : f32 to vector<8x128xf32>
    %325 = arith.subf %324, %316 : vector<8x128xf32>
    %326 = arith.mulf %325, %323 : vector<8x128xf32>
    %327 = arith.mulf %316, %288 : vector<8x128xf32>
    %328 = arith.addf %326, %327 : vector<8x128xf32>
    %329 = arith.addi %13, %c7_i32 : i32
    %c1_i32_74 = arith.constant 1 : i32
    %330 = arith.addi %329, %c1_i32_74 : i32
    %331 = vector.broadcast %330 : i32 to vector<8x1xi32>
    %332 = arith.cmpi eq, %12, %331 : vector<8x1xi32>
    %333 = vector.shape_cast %332 : vector<8x1xi1> to vector<8x1xi1>
    %334 = vector.broadcast %333 : vector<8x1xi1> to vector<8x128xi1>
    %335 = arith.select %334, %328, %295 : vector<8x128xi1>, vector<8x128xf32>
    %c8_i32_75 = arith.constant 8 : i32
    %c0_76 = arith.constant 0 : index
    %c0_77 = arith.constant 0 : index
    %336 = vector.load %arg12[%c0_76, %c0_77] : memref<8x128xf32, #tpu.memory_space<vmem>>, vector<8x128xf32>
    tpu.vector_store %arg12[%c0_76, %c0_77], %328 {strides = array<i32>} : memref<8x128xf32, #tpu.memory_space<vmem>>, vector<8x128xf32>,
    %c0_78 = arith.constant 0 : index
    %c0_79 = arith.constant 0 : index
    %337 = vector.load %arg13[%c0_78, %c0_79] : memref<8x128xf32, #tpu.memory_space<vmem>>, vector<8x128xf32>
    tpu.vector_store %arg13[%c0_78, %c0_79], %335 {strides = array<i32>} : memref<8x128xf32, #tpu.memory_space<vmem>>, vector<8x128xf32>,
    %c0_i32_80 = arith.constant 0 : i32
    %338 = arith.cmpi eq, %arg1, %c0_i32_80 : i32
    %339 = arith.extui %338 : i1 to i32
    %c0_i32_81 = arith.constant 0 : i32
    %340 = arith.cmpi ne, %339, %c0_i32_81 : i32
    scf.if %340 {
      %c0_82 = arith.constant 0 : index
      %c0_83 = arith.constant 0 : index
      %341 = vector.load %arg8[%c0_82, %c0_83] : memref<128x128xf32, #tpu.memory_space<vmem>>, vector<128x128xf32>
      %cst_84 = arith.constant dense<0.000000e+00> : vector<8x128xf32>
      %342 = tpu.matmul %335, %341, %cst_84 {dimension_numbers = #tpu.dot_dimension_numbers<[1], [0], [0], [1], [0, 0, 1, 1], [], []>} : vector<8x128xf32>, vector<128x128xf32>, vector<8x128xf32> -> vector<8x128xf32>
      %c0_85 = arith.constant 0 : index
      %c0_86 = arith.constant 0 : index
      %343 = vector.load %arg9[%c0_85, %c0_86] : memref<1x128xf32, #tpu.memory_space<vmem>>, vector<1x128xf32>
      %344 = vector.broadcast %343 : vector<1x128xf32> to vector<8x128xf32>
      %345 = arith.addf %342, %344 : vector<8x128xf32>
      %c0_87 = arith.constant 0 : index
      %c0_88 = arith.constant 0 : index
      %346 = vector.load %arg10[%c0_87, %c0_88] : memref<8x128xf32, #tpu.memory_space<vmem>>, vector<8x128xf32>
      tpu.vector_store %arg10[%c0_87, %c0_88], %345 {strides = array<i32>} : memref<8x128xf32, #tpu.memory_space<vmem>>, vector<8x128xf32>,
    } else {
    }
    return
  }
  func.func @transform_0(%arg0: i32, %arg1: i32) -> (i32, i32) {
    %c1_i32 = arith.constant 1 : i32
    %0 = arith.muli %arg0, %c1_i32 : i32
    %1 = arith.addi %0, %arg1 : i32
    %c0_i32 = arith.constant 0 : i32
    %c0_i32_0 = arith.constant 0 : i32
    return %1, %c0_i32 : i32, i32
  }
  func.func @transform_1(%arg0: i32, %arg1: i32) -> (i32, i32) {
    %c0_i32 = arith.constant 0 : i32
    %c0_i32_0 = arith.constant 0 : i32
    return %arg0, %c0_i32 : i32, i32
  }
  func.func @transform_2(%arg0: i32, %arg1: i32) -> (i32, i32) {
    %c0_i32 = arith.constant 0 : i32
    %c0_i32_0 = arith.constant 0 : i32
    %c0_i32_1 = arith.constant 0 : i32
    return %c0_i32, %c0_i32_0 : i32, i32
  }
  func.func @transform_3(%arg0: i32, %arg1: i32) -> (i32, i32) {
    %c0_i32 = arith.constant 0 : i32
    %c0_i32_0 = arith.constant 0 : i32
    %c0_i32_1 = arith.constant 0 : i32
    return %c0_i32, %c0_i32_0 : i32, i32
  }
  func.func @transform_4(%arg0: i32, %arg1: i32) -> (i32, i32) {
    %c0_i32 = arith.constant 0 : i32
    %c0_i32_0 = arith.constant 0 : i32
    %c0_i32_1 = arith.constant 0 : i32
    return %c0_i32, %c0_i32_0 : i32, i32
  }
  func.func @transform_5(%arg0: i32, %arg1: i32) -> (i32, i32) {
    %c0_i32 = arith.constant 0 : i32
    %c0_i32_0 = arith.constant 0 : i32
    %c0_i32_1 = arith.constant 0 : i32
    return %c0_i32, %c0_i32_0 : i32, i32
  }
  func.func @transform_6(%arg0: i32, %arg1: i32) -> (i32, i32) {
    %c0_i32 = arith.constant 0 : i32
    %c0_i32_0 = arith.constant 0 : i32
    %c0_i32_1 = arith.constant 0 : i32
    return %c0_i32, %c0_i32_0 : i32, i32
  }
  func.func @transform_7(%arg0: i32, %arg1: i32) -> (i32, i32) {
    %c0_i32 = arith.constant 0 : i32
    %c0_i32_0 = arith.constant 0 : i32
    %c0_i32_1 = arith.constant 0 : i32
    return %c0_i32, %c0_i32_0 : i32, i32
  }
  func.func @transform_8(%arg0: i32, %arg1: i32) -> (i32, i32) {
    %c0_i32 = arith.constant 0 : i32
    %c0_i32_0 = arith.constant 0 : i32
    return %arg0, %c0_i32 : i32, i32
  }
}

</mosaic_0001>

<llo_original>
// kernel: tpu_custom_call.1
$region0: #{tpu_custom_call.1}
  #allocation0 [shape = 'u32[]', space=smem, size = 0x4, offset = 0x4, fixed_abs, tag = 'smem constant byte address 0x4 - core index']
  #allocation1 [shape = 'u32[144,128]{1,0:T(1,128)}', space=vmem, size = 0x12000, scoped, tag = 'internal scratch']
  #allocation2 [shape = 'f32[64,384]{1,0:T(8,128)}', space=vmem, size = 0x18000, scoped, tag = 'scratch operand']
  #allocation3 [shape = 'f32[8,128]{1,0:T(8,128)}', space=vmem, size = 0x1000, scoped, tag = 'scratch operand']
  #allocation4 [shape = 'f32[8,128]{1,0:T(8,128)}', space=vmem, size = 0x1000, scoped, tag = 'scratch operand']
  %s0 = inlined_call_operand.vmem [shape: f32[64,32], index: 0, kind: input, shape index: {}]
  %s1 = inlined_call_operand.vmem [shape: s32[8,1], index: 1, kind: input, shape index: {}]
  %s2 = inlined_call_operand.vmem [shape: f32[32,384], index: 2, kind: input, shape index: {}]
  %s3 = inlined_call_operand.vmem [shape: f32[1,384], index: 3, kind: input, shape index: {}]
  %s4 = inlined_call_operand.hbm [shape: f32[128,384], index: 4, kind: input, shape index: {}]
  %s5 = inlined_call_operand.vmem [shape: f32[1,128], index: 5, kind: input, shape index: {}]
  %s6 = inlined_call_operand.hbm [shape: f32[128,128], index: 6, kind: input, shape index: {}]
  %s7 = inlined_call_operand.vmem [shape: f32[1,128], index: 7, kind: input, shape index: {}]
  %s8 = inlined_call_operand.hbm [shape: f32[8,128], index: 8, kind: output, shape index: {}]
  %s9 = sld [smem:[#allocation0]]
  $region58: #{tpu_custom_call.1} parent=0
    _
  %s11 = ssub.s32 1, %s9
  %s12 = scalar_select 0, %s11, %s9
  $region1: #{tpu_custom_call.1} parent=0
    #allocation5 [shape = 'u8[196608]{0}', space=vmem, size = 0x30000, scoped, tag = 'input window, operand 4, single buffered']
    #allocation6 [shape = 's32[1]{0}', space=sflag, size = 0x4, scoped, tag = 'scoped memory for tpu_custom_call.1']
    #allocation7 [shape = 's32[1]{0}', space=sflag, size = 0x4, scoped, tag = 'scoped memory for tpu_custom_call.1']
    #allocation8 [shape = 'u8[65536]{0}', space=vmem, size = 0x10000, scoped, tag = 'input window, operand 6, single buffered']
    #allocation9 [shape = 's32[1]{0}', space=sflag, size = 0x4, scoped, tag = 'scoped memory for tpu_custom_call.1']
    #allocation10 [shape = 'u8[4096]{0}', space=vmem, size = 0x1000, scoped, tag = 'output window, operand 0, single buffered']
    %13 = vsyncpa [#allocation6], 0
    %14 = vsyncpa [#allocation9], 0
    %15 = vsyncpa [#allocation7], 0
    // Predicated region
    $region2: #{tpu_custom_call.1} parent=1 // pred_check
      _
    $region3: #{tpu_custom_call.1} parent=1 // pred_check_branch
      %17 = sbr.rel (0) target = $region5
    $region4: #{tpu_custom_call.1} parent=1 // pred_region
      %s18 = sadd.s32 0, 0
      %s19 = smul.u32 8, %s18
      %p20 = scmp.lt.s32.totalorder %s19, 7
      %s21 = scalar_select %p20, %s19, 7
      %s22 = smul.addr %s21, 8
      %s23 = scalar_lea.vmem %s0, %s22
      %s24 = sadd.s32 0, 0
      %s25 = smul.u32 8, %s24
    $region5: #{tpu_custom_call.1} parent=1 // pred_fallthru
      _
    // Predicated region
    $region6: #{tpu_custom_call.1} parent=1 // pred_check
      _
    $region7: #{tpu_custom_call.1} parent=1 // pred_check_branch
      %27 = sbr.rel (0) target = $region9
    $region8: #{tpu_custom_call.1} parent=1 // pred_region
      _
    $region9: #{tpu_custom_call.1} parent=1 // pred_fallthru
      _
    // Predicated region
    $region10: #{tpu_custom_call.1} parent=1 // pred_check
      _
    $region11: #{tpu_custom_call.1} parent=1 // pred_check_branch
      %29 = sbr.rel (0) target = $region13
    $region12: #{tpu_custom_call.1} parent=1 // pred_region
      _
    $region13: #{tpu_custom_call.1} parent=1 // pred_fallthru
      _
    // Predicated region
    $region14: #{tpu_custom_call.1} parent=1 // pred_check
      _
    $region15: #{tpu_custom_call.1} parent=1 // pred_check_branch
      %31 = sbr.rel (0) target = $region17
    $region16: #{tpu_custom_call.1} parent=1 // pred_region
      _
    $region17: #{tpu_custom_call.1} parent=1 // pred_fallthru
      _
    // Predicated region
    $region18: #{tpu_custom_call.1} parent=1 // pred_check
      _
    $region19: #{tpu_custom_call.1} parent=1 // pred_check_branch
      %33 = sbr.rel (0) target = $region21
    $region20: #{tpu_custom_call.1} parent=1 // pred_region
      %s35 = ssub.s32 6144, 6144
      %36 = vsyncadd [#allocation6], %s35
      %s37 = sshll.u32 [#allocation5], 4
      %s38 = int_to_ptr.vmem [resolvable:$true] %s37
      %43 = dma.hbm_to_vmem [thread:$0]  %s4, 6144, %s38, [#allocation6], 384, 384, 24
    $region21: #{tpu_custom_call.1} parent=1 // pred_fallthru
      _
    // Predicated region
    $region22: #{tpu_custom_call.1} parent=1 // pred_check
      _
    $region23: #{tpu_custom_call.1} parent=1 // pred_check_branch
      %45 = sbr.rel (0) target = $region25
    $region24: #{tpu_custom_call.1} parent=1 // pred_region
      _
    $region25: #{tpu_custom_call.1} parent=1 // pred_fallthru
      _
    // Predicated region
    $region26: #{tpu_custom_call.1} parent=1 // pred_check
      _
    $region27: #{tpu_custom_call.1} parent=1 // pred_check_branch
      %47 = sbr.rel (0) target = $region29
    $region28: #{tpu_custom_call.1} parent=1 // pred_region
      %s49 = ssub.s32 2048, 2048
      %50 = vsyncadd [#allocation9], %s49
      %s51 = sshll.u32 [#allocation8], 4
      %s52 = int_to_ptr.vmem [resolvable:$true] %s51
      %57 = dma.hbm_to_vmem [thread:$0]  %s6, 2048, %s52, [#allocation9], 128, 128, 8
    $region29: #{tpu_custom_call.1} parent=1 // pred_fallthru
      _
    // Predicated region
    $region30: #{tpu_custom_call.1} parent=1 // pred_check
      _
    $region31: #{tpu_custom_call.1} parent=1 // pred_check_branch
      %59 = sbr.rel (0) target = $region33
    $region32: #{tpu_custom_call.1} parent=1 // pred_region
      _
    $region33: #{tpu_custom_call.1} parent=1 // pred_fallthru
      _
    // Predicated region
    $region34: #{tpu_custom_call.1} parent=1 // pred_check
      _
    $region35: #{tpu_custom_call.1} parent=1 // pred_check_branch
      %61 = sbr.rel (0) target = $region37
    $region36: #{tpu_custom_call.1} parent=1 // pred_region
      %62 = dma.done [#allocation6], 6144
    $region37: #{tpu_custom_call.1} parent=1 // pred_fallthru
      _
    // Predicated region
    $region38: #{tpu_custom_call.1} parent=1 // pred_check
      _
    $region39: #{tpu_custom_call.1} parent=1 // pred_check_branch
      %64 = sbr.rel (0) target = $region41
    $region40: #{tpu_custom_call.1} parent=1 // pred_region
      %65 = dma.done [#allocation9], 2048
    $region41: #{tpu_custom_call.1} parent=1 // pred_fallthru
      _
    %s66 = sadd.s32 0, 0
    %s67 = smul.u32 8, %s66
    %p68 = scmp.lt.s32.totalorder %s67, 7
    %s69 = scalar_select %p68, %s67, 7
    %s70 = smul.addr %s69, 8
    %s71 = scalar_lea.vmem %s0, %s70
    %s72 = sadd.s32 0, 0
    %s73 = smul.u32 8, %s72
    %p74 = scmp.lt.s32.totalorder %s73, 7
    %s75 = scalar_select %p74, %s73, 7
    %s76 = smul.addr %s75, 8
    %s77 = scalar_lea.vmem %s0, %s76
    %s78 = sadd.s32 0, 0
    %s79 = smul.u32 8, %s78
    %p80 = scmp.eq.s32.totalorder 0, 0
    // Predicated region
    $region42: #{tpu_custom_call.1} parent=1 // pred_check
      %p81 = pneg %p80
    $region43: #{tpu_custom_call.1} parent=1 // pred_check_branch
      %83 = sbr.rel (%p81) target = $region45
    $region44: #{tpu_custom_call.1} parent=1 // pred_region
      %84 = vst [vmem:[#allocation3] sm:$0xff] 0.0
      %85 = vst [vmem:[#allocation4] sm:$0xff] 0.0
    $region45: #{tpu_custom_call.1} parent=1 // pred_fallthru
      _
    %v86 = vld [vmem:[%s77] sm:$0xff]
    %v87 = vld [vmem:[%s77 + $0x8] sm:$0xff]
    %v88 = vld [vmem:[%s77 + $0x10] sm:$0xff]
    %v89 = vld [vmem:[%s77 + $0x18] sm:$0xff]
    %v90 = vld [vmem:[%s77 + $0x20] sm:$0xff]
    %v91 = vld [vmem:[%s77 + $0x28] sm:$0xff]
    %v92 = vld [vmem:[%s77 + $0x30] sm:$0xff]
    %v93 = vld [vmem:[%s77 + $0x38] sm:$0xff]
    %v94 = vld [vmem:[%s2] sm:$0xff]
    %v95 = vld [vmem:[%s2 + $0x8] sm:$0xff]
    %v96 = vld [vmem:[%s2 + $0x10] sm:$0xff]
    %v97 = vld [vmem:[%s2 + $0x18] sm:$0xff]
    %v98 = vld [vmem:[%s2 + $0x20] sm:$0xff]
    %v99 = vld [vmem:[%s2 + $0x28] sm:$0xff]
    %v100 = vld [vmem:[%s2 + $0x30] sm:$0xff]
    %v101 = vld [vmem:[%s2 + $0x38] sm:$0xff]
    %v102 = vld [vmem:[%s2 + $0x40] sm:$0xff]
    %v103 = vld [vmem:[%s2 + $0x48] sm:$0xff]
    %v104 = vld [vmem:[%s2 + $0x50] sm:$0xff]
    %v105 = vld [vmem:[%s2 + $0x58] sm:$0xff]
    %v106 = vld [vmem:[%s3] sm:$0x7]
    %v108 = vlaneseq
    %v109 = vshrl.u32 %v108, 7
    %v110 = vsub.s32 0, %v109
    %v111 = vrot.slane %v106, %v110
    %v112 = vlaneseq
    %v113 = vshrl.u32 %v112, 7
    %v114 = vsub.s32 1, %v113
    %v115 = vrot.slane %v106, %v114
    %v116 = vlaneseq
    %v117 = vshrl.u32 %v116, 7
    %v118 = vsub.s32 2, %v117
    %v119 = vrot.slane %v106, %v118
    %vm123 = vcmask 261120
    %v125 = vsel %vm123, %v86, 0
    %v128 = vsel %vm123, %v87, 0
    %v131 = vsel %vm123, %v88, 0
    %v134 = vsel %vm123, %v89, 0
    %v137 = vsel %vm123, %v90, 0
    %v140 = vsel %vm123, %v91, 0
    %v143 = vsel %vm123, %v92, 0
    %v146 = vsel %vm123, %v93, 0
    %148 = vmatprep.subr.mxu0 %v95
    %149 = vmatpush1.msra.mxu0 %v94
    %150 = vmatprep.subr.mxu0 %v98
    %151 = vmatpush1.msra.mxu0 %v97
    %152 = vmatprep.subr.mxu0 %v101
    %153 = vmatpush1.msra.mxu0 %v100
    %154 = vmatprep.subr.mxu0 %v104
    %155 = vmatpush1.msra.mxu0 %v103
    %156 = vmatprep.subr.mxu0 0.0
    %157 = vmatpush1.msra.mxu0 0.0
    %158 = vmatprep.subr.mxu0 0.0
    %159 = vmatpush1.msra.mxu0 0.0
    %160 = vmatprep.subr.mxu0 0.0
    %161 = vmatpush1.msra.mxu0 0.0
    %162 = vmatprep.subr.mxu0 0.0
    %163 = vmatpush1.msra.mxu0 0.0
    %164 = vmatprep.subr.mxu0 0.0
    %165 = vmatpush1.msra.mxu0 0.0
    %166 = vmatprep.subr.mxu0 0.0
    %167 = vmatpush1.msra.mxu0 0.0
    %168 = vmatprep.subr.mxu0 0.0
    %169 = vmatpush1.msra.mxu0 0.0
    %170 = vmatprep.subr.mxu0 0.0
    %171 = vmatpush1.msra.mxu0 0.0
    %172 = vmatprep.subr.mxu0 0.0
    %173 = vmatpush1.msra.mxu0 0.0
    %174 = vmatprep.subr.mxu0 0.0
    %175 = vmatpush1.msra.mxu0 0.0
    %176 = vmatprep.subr.mxu0 0.0
    %177 = vmatpush1.msra.mxu0 0.0
    %178 = vmatprep.subr.mxu0 0.0
    %179 = vmatpush1.msra.mxu0 0.0
    %180 = vmatprep.subr.mxu0 0.0
    %181 = vmatpush1.msra.mxu0 0.0
    %182 = vmatprep.subr.mxu0 0.0
    %183 = vmatpush1.msra.mxu0 0.0
    %184 = vmatprep.subr.mxu0 0.0
    %185 = vmatpush1.msra.mxu0 0.0
    %186 = vmatprep.subr.mxu0 0.0
    %187 = vmatpush1.msra.mxu0 0.0
    %188 = vmatprep.subr.mxu0 0.0
    %189 = vmatpush1.msra.mxu0 0.0
    %190 = vmatprep.subr.mxu0 0.0
    %191 = vmatpush1.msra.mxu0 0.0
    %192 = vmatprep.subr.mxu0 0.0
    %193 = vmatpush1.msra.mxu0 0.0
    %194 = vmatprep.subr.mxu0 0.0
    %195 = vmatpush1.msra.mxu0 0.0
    %196 = vmatprep.subr.mxu0 0.0
    %197 = vmatpush1.msra.mxu0 0.0
    %198 = vmatprep.subr.mxu0 0.0
    %199 = vmatpush1.msra.mxu0 0.0
    %200 = vmatprep.subr.mxu0 0.0
    %201 = vmatpush1.msra.mxu0 0.0
    %202 = vmatprep.subr.mxu0 0.0
    %203 = vmatpush1.msra.mxu0 0.0
    %204 = vmatprep.subr.mxu0 0.0
    %205 = vmatpush1.msra.mxu0 0.0
    %206 = vmatprep.subr.mxu0 0.0
    %207 = vmatpush1.msra.mxu0 0.0
    %208 = vmatprep.subr.mxu0 0.0
    %209 = vmatpush1.msra.mxu0 0.0
    %210 = vmatprep.subr.mxu0 0.0
    %211 = vmatpush1.msra.mxu0 0.0
    %212 = vmatprep.mubr.f32.mxu0 0.0
    %213 = vmatmul.mubr.f32.gmra.mrb[0].mxu0 %v125
    %v214 = vpop.f32.mrb[0].mxu0
    %v215 = vadd.f32 %v111, %v214
    %v216 = vpop.f32.mrb[0].mxu0
    %v217 = vadd.f32 %v115, %v216
    %218 = vmatprep.mubr.f32.mxu0 0.0
    %219 = vmatmul.mubr.f32.gmra.mrb[0].mxu0 %v128
    %v220 = vpop.f32.mrb[0].mxu0
    %v221 = vadd.f32 %v111, %v220
    %v222 = vpop.f32.mrb[0].mxu0
    %v223 = vadd.f32 %v115, %v222
    %224 = vmatprep.mubr.f32.mxu0 0.0
    %225 = vmatmul.mubr.f32.gmra.mrb[0].mxu0 %v131
    %v226 = vpop.f32.mrb[0].mxu0
    %v227 = vadd.f32 %v111, %v226
    %v228 = vpop.f32.mrb[0].mxu0
    %v229 = vadd.f32 %v115, %v228
    %230 = vmatprep.mubr.f32.mxu0 0.0
    %231 = vmatmul.mubr.f32.gmra.mrb[0].mxu0 %v134
    %v232 = vpop.f32.mrb[0].mxu0
    %v233 = vadd.f32 %v111, %v232
    %v234 = vpop.f32.mrb[0].mxu0
    %v235 = vadd.f32 %v115, %v234
    %236 = vmatprep.mubr.f32.mxu0 0.0
    %237 = vmatmul.mubr.f32.gmra.mrb[0].mxu0 %v137
    %v238 = vpop.f32.mrb[0].mxu0
    %v239 = vadd.f32 %v111, %v238
    %v240 = vpop.f32.mrb[0].mxu0
    %v241 = vadd.f32 %v115, %v240
    %242 = vmatprep.mubr.f32.mxu0 0.0
    %243 = vmatmul.mubr.f32.gmra.mrb[0].mxu0 %v140
    %v244 = vpop.f32.mrb[0].mxu0
    %v245 = vadd.f32 %v111, %v244
    %v246 = vpop.f32.mrb[0].mxu0
    %v247 = vadd.f32 %v115, %v246
    %248 = vmatprep.mubr.f32.mxu0 0.0
    %249 = vmatmul.mubr.f32.gmra.mrb[0].mxu0 %v143
    %v250 = vpop.f32.mrb[0].mxu0
    %v251 = vadd.f32 %v111, %v250
    %v252 = vpop.f32.mrb[0].mxu0
    %v253 = vadd.f32 %v115, %v252
    %254 = vmatprep.mubr.f32.mxu0 0.0
    %255 = vmatmul.mubr.f32.gmra.mrb[0].mxu0 %v146
    %v256 = vpop.f32.mrb[0].mxu0
    %v257 = vadd.f32 %v111, %v256
    %v258 = vpop.f32.mrb[0].mxu0
    %v259 = vadd.f32 %v115, %v258
    %260 = vdwg.mxu0
    %261 = vmatprep.subr.mxu0 0.0
    %262 = vmatpush1.msra.mxu0 %v96
    %263 = vmatprep.subr.mxu0 0.0
    %264 = vmatpush1.msra.mxu0 %v99
    %265 = vmatprep.subr.mxu0 0.0
    %266 = vmatpush1.msra.mxu0 %v102
    %267 = vmatprep.subr.mxu0 0.0
    %268 = vmatpush1.msra.mxu0 %v105
    %269 = vmatprep.subr.mxu0 0.0
    %270 = vmatpush1.msra.mxu0 0.0
    %271 = vmatprep.subr.mxu0 0.0
    %272 = vmatpush1.msra.mxu0 0.0
    %273 = vmatprep.subr.mxu0 0.0
    %274 = vmatpush1.msra.mxu0 0.0
    %275 = vmatprep.subr.mxu0 0.0
    %276 = vmatpush1.msra.mxu0 0.0
    %277 = vmatprep.subr.mxu0 0.0
    %278 = vmatpush1.msra.mxu0 0.0
    %279 = vmatprep.subr.mxu0 0.0
    %280 = vmatpush1.msra.mxu0 0.0
    %281 = vmatprep.subr.mxu0 0.0
    %282 = vmatpush1.msra.mxu0 0.0
    %283 = vmatprep.subr.mxu0 0.0
    %284 = vmatpush1.msra.mxu0 0.0
    %285 = vmatprep.subr.mxu0 0.0
    %286 = vmatpush1.msra.mxu0 0.0
    %287 = vmatprep.subr.mxu0 0.0
    %288 = vmatpush1.msra.mxu0 0.0
    %289 = vmatprep.subr.mxu0 0.0
    %290 = vmatpush1.msra.mxu0 0.0
    %291 = vmatprep.subr.mxu0 0.0
    %292 = vmatpush1.msra.mxu0 0.0
    %293 = vmatprep.subr.mxu0 0.0
    %294 = vmatpush1.msra.mxu0 0.0
    %295 = vmatprep.subr.mxu0 0.0
    %296 = vmatpush1.msra.mxu0 0.0
    %297 = vmatprep.subr.mxu0 0.0
    %298 = vmatpush1.msra.mxu0 0.0
    %299 = vmatprep.subr.mxu0 0.0
    %300 = vmatpush1.msra.mxu0 0.0
    %301 = vmatprep.subr.mxu0 0.0
    %302 = vmatpush1.msra.mxu0 0.0
    %303 = vmatprep.subr.mxu0 0.0
    %304 = vmatpush1.msra.mxu0 0.0
    %305 = vmatprep.subr.mxu0 0.0
    %306 = vmatpush1.msra.mxu0 0.0
    %307 = vmatprep.subr.mxu0 0.0
    %308 = vmatpush1.msra.mxu0 0.0
    %309 = vmatprep.subr.mxu0 0.0
    %310 = vmatpush1.msra.mxu0 0.0
    %311 = vmatprep.subr.mxu0 0.0
    %312 = vmatpush1.msra.mxu0 0.0
    %313 = vmatprep.subr.mxu0 0.0
    %314 = vmatpush1.msra.mxu0 0.0
    %315 = vmatprep.subr.mxu0 0.0
    %316 = vmatpush1.msra.mxu0 0.0
    %317 = vmatprep.subr.mxu0 0.0
    %318 = vmatpush1.msra.mxu0 0.0
    %319 = vmatprep.subr.mxu0 0.0
    %320 = vmatpush1.msra.mxu0 0.0
    %321 = vmatprep.subr.mxu0 0.0
    %322 = vmatpush1.msra.mxu0 0.0
    %323 = vmatprep.subr.mxu0 0.0
    %324 = vmatpush1.msra.mxu0 0.0
    %325 = vmatprep.mubr.f32.mxu0 0.0
    %326 = vmatmul.mubr.f32.gmra.mrb[0].mxu0 %v125
    %v327 = vpop.f32.mrb[0].mxu0
    %v328 = vadd.f32 %v119, %v327
    %v329 = vpop.f32.mrb[0].mxu0
    %330 = vmatprep.mubr.f32.mxu0 0.0
    %331 = vmatmul.mubr.f32.gmra.mrb[0].mxu0 %v128
    %v332 = vpop.f32.mrb[0].mxu0
    %v333 = vadd.f32 %v119, %v332
    %v334 = vpop.f32.mrb[0].mxu0
    %335 = vmatprep.mubr.f32.mxu0 0.0
    %336 = vmatmul.mubr.f32.gmra.mrb[0].mxu0 %v131
    %v337 = vpop.f32.mrb[0].mxu0
    %v338 = vadd.f32 %v119, %v337
    %v339 = vpop.f32.mrb[0].mxu0
    %340 = vmatprep.mubr.f32.mxu0 0.0
    %341 = vmatmul.mubr.f32.gmra.mrb[0].mxu0 %v134
    %v342 = vpop.f32.mrb[0].mxu0
    %v343 = vadd.f32 %v119, %v342
    %v344 = vpop.f32.mrb[0].mxu0
    %345 = vmatprep.mubr.f32.mxu0 0.0
    %346 = vmatmul.mubr.f32.gmra.mrb[0].mxu0 %v137
    %v347 = vpop.f32.mrb[0].mxu0
    %v348 = vadd.f32 %v119, %v347
    %v349 = vpop.f32.mrb[0].mxu0
    %350 = vmatprep.mubr.f32.mxu0 0.0
    %351 = vmatmul.mubr.f32.gmra.mrb[0].mxu0 %v140
    %v352 = vpop.f32.mrb[0].mxu0
    %v353 = vadd.f32 %v119, %v352
    %v354 = vpop.f32.mrb[0].mxu0
    %355 = vmatprep.mubr.f32.mxu0 0.0
    %356 = vmatmul.mubr.f32.gmra.mrb[0].mxu0 %v143
    %v357 = vpop.f32.mrb[0].mxu0
    %v358 = vadd.f32 %v119, %v357
    %v359 = vpop.f32.mrb[0].mxu0
    %360 = vmatprep.mubr.f32.mxu0 0.0
    %361 = vmatmul.mubr.f32.gmra.mrb[0].mxu0 %v146
    %v362 = vpop.f32.mrb[0].mxu0
    %v363 = vadd.f32 %v119, %v362
    %v364 = vpop.f32.mrb[0].mxu0
    %365 = vdwg.mxu0
    %366 = vst [vmem:[#allocation2] sm:$0xff] %v215
    %367 = vst [vmem:[#allocation2 + $0x8] sm:$0xff] %v217
    %368 = vst [vmem:[#allocation2 + $0x10] sm:$0xff] %v328
    %369 = vst [vmem:[#allocation2 + $0x18] sm:$0xff] %v221
    %370 = vst [vmem:[#allocation2 + $0x20] sm:$0xff] %v223
    %371 = vst [vmem:[#allocation2 + $0x28] sm:$0xff] %v333
    %372 = vst [vmem:[#allocation2 + $0x30] sm:$0xff] %v227
    %373 = vst [vmem:[#allocation2 + $0x38] sm:$0xff] %v229
    %374 = vst [vmem:[#allocation2 + $0x40] sm:$0xff] %v338
    %375 = vst [vmem:[#allocation2 + $0x48] sm:$0xff] %v233
    %376 = vst [vmem:[#allocation2 + $0x50] sm:$0xff] %v235
    %377 = vst [vmem:[#allocation2 + $0x58] sm:$0xff] %v343
    %378 = vst [vmem:[#allocation2 + $0x60] sm:$0xff] %v239
    %379 = vst [vmem:[#allocation2 + $0x68] sm:$0xff] %v241
    %380 = vst [vmem:[#allocation2 + $0x70] sm:$0xff] %v348
    %381 = vst [vmem:[#allocation2 + $0x78] sm:$0xff] %v245
    %382 = vst [vmem:[#allocation2 + $0x80] sm:$0xff] %v247
    %383 = vst [vmem:[#allocation2 + $0x88] sm:$0xff] %v353
    %384 = vst [vmem:[#allocation2 + $0x90] sm:$0xff] %v251
    %385 = vst [vmem:[#allocation2 + $0x98] sm:$0xff] %v253
    %386 = vst [vmem:[#allocation2 + $0xa0] sm:$0xff] %v358
    %387 = vst [vmem:[#allocation2 + $0xa8] sm:$0xff] %v257
    %388 = vst [vmem:[#allocation2 + $0xb0] sm:$0xff] %v259
    %389 = vst [vmem:[#allocation2 + $0xb8] sm:$0xff] %v363
    %v390 = vld [vmem:[#allocation5] sm:$0xff]
    %v391 = vld [vmem:[#allocation5 + $0x8] sm:$0xff]
    %v392 = vld [vmem:[#allocation5 + $0x10] sm:$0xff]
    %v393 = vld [vmem:[#allocation5 + $0x18] sm:$0xff]
    %v394 = vld [vmem:[#allocation5 + $0x20] sm:$0xff]
    %v395 = vld [vmem:[#allocation5 + $0x28] sm:$0xff]
    %v396 = vld [vmem:[#allocation5 + $0x30] sm:$0xff]
    %v397 = vld [vmem:[#allocation5 + $0x38] sm:$0xff]
    %v398 = vld [vmem:[#allocation5 + $0x40] sm:$0xff]
    %v399 = vld [vmem:[#allocation5 + $0x48] sm:$0xff]
    %v400 = vld [vmem:[#allocation5 + $0x50] sm:$0xff]
    %v401 = vld [vmem:[#allocation5 + $0x58] sm:$0xff]
    %v402 = vld [vmem:[#allocation5 + $0x60] sm:$0xff]
    %v403 = vld [vmem:[#allocation5 + $0x68] sm:$0xff]
    %v404 = vld [vmem:[#allocation5 + $0x70] sm:$0xff]
    %v405 = vld [vmem:[#allocation5 + $0x78] sm:$0xff]
    %v406 = vld [vmem:[#allocation5 + $0x80] sm:$0xff]
    %v407 = vld [vmem:[#allocation5 + $0x88] sm:$0xff]
    %v408 = vld [vmem:[#allocation5 + $0x90] sm:$0xff]
    %v409 = vld [vmem:[#allocation5 + $0x98] sm:$0xff]
    %v410 = vld [vmem:[#allocation5 + $0xa0] sm:$0xff]
    %v411 = vld [vmem:[#allocation5 + $0xa8] sm:$0xff]
    %v412 = vld [vmem:[#allocation5 + $0xb0] sm:$0xff]
    %v413 = vld [vmem:[#allocation5 + $0xb8] sm:$0xff]
    %v414 = vld [vmem:[#allocation5 + $0xc0] sm:$0xff]
    %v415 = vld [vmem:[#allocation5 + $0xc8] sm:$0xff]
    %v416 = vld [vmem:[#allocation5 + $0xd0] sm:$0xff]
    %v417 = vld [vmem:[#allocation5 + $0xd8] sm:$0xff]
    %v418 = vld [vmem:[#allocation5 + $0xe0] sm:$0xff]
    %v419 = vld [vmem:[#allocation5 + $0xe8] sm:$0xff]
    %v420 = vld [vmem:[#allocation5 + $0xf0] sm:$0xff]
    %v421 = vld [vmem:[#allocation5 + $0xf8] sm:$0xff]
    %v422 = vld [vmem:[#allocation5 + $0x100] sm:$0xff]
    %v423 = vld [vmem:[#allocation5 + $0x108] sm:$0xff]
    %v424 = vld [vmem:[#allocation5 + $0x110] sm:$0xff]
    %v425 = vld [vmem:[#allocation5 + $0x118] sm:$0xff]
    %v426 = vld [vmem:[#allocation5 + $0x120] sm:$0xff]
    %v427 = vld [vmem:[#allocation5 + $0x128] sm:$0xff]
    %v428 = vld [vmem:[#allocation5 + $0x130] sm:$0xff]
    %v429 = vld [vmem:[#allocation5 + $0x138] sm:$0xff]
    %v430 = vld [vmem:[#allocation5 + $0x140] sm:$0xff]
    %v431 = vld [vmem:[#allocation5 + $0x148] sm:$0xff]
    %v432 = vld [vmem:[#allocation5 + $0x150] sm:$0xff]
    %v433 = vld [vmem:[#allocation5 + $0x158] sm:$0xff]
    %v434 = vld [vmem:[#allocation5 + $0x160] sm:$0xff]
    %v435 = vld [vmem:[#allocation5 + $0x168] sm:$0xff]
    %v436 = vld [vmem:[#allocation5 + $0x170] sm:$0xff]
    %v437 = vld [vmem:[#allocation5 + $0x178] sm:$0xff]
    %v438 = vld [vmem:[%s5] sm:$0x1]
    %v439 = vld [vmem:[%s1] sm:$0xff]
    %s440 = smul.u32 0, 8
    %v441 = vld [vmem:[#allocation3] sm:$0xff]
    %v442 = vld [vmem:[#allocation4] sm:$0xff]
    %s443 = smul.u32 0, 3
    %s444 = smul.addr %s443, 8
    %s445 = scalar_lea.vmem [#allocation2], %s444
    %v446 = vld [vmem:[%s445] sm:$0xff]
    %v447 = vld [vmem:[%s445 + $0x8] sm:$0xff]
    %v448 = vld [vmem:[%s445 + $0x10] sm:$0xff]
    %449 = vmatprep.subr.mxu0 %v391
    %450 = vmatpush1.msra.mxu0 %v390
    %451 = vmatprep.subr.mxu0 %v394
    %452 = vmatpush1.msra.mxu0 %v393
    %453 = vmatprep.subr.mxu0 %v397
    %454 = vmatpush1.msra.mxu0 %v396
    %455 = vmatprep.subr.mxu0 %v400
    %456 = vmatpush1.msra.mxu0 %v399
    %457 = vmatprep.subr.mxu0 %v403
    %458 = vmatpush1.msra.mxu0 %v402
    %459 = vmatprep.subr.mxu0 %v406
    %460 = vmatpush1.msra.mxu0 %v405
    %461 = vmatprep.subr.mxu0 %v409
    %462 = vmatpush1.msra.mxu0 %v408
    %463 = vmatprep.subr.mxu0 %v412
    %464 = vmatpush1.msra.mxu0 %v411
    %465 = vmatprep.subr.mxu0 %v415
    %466 = vmatpush1.msra.mxu0 %v414
    %467 = vmatprep.subr.mxu0 %v418
    %468 = vmatpush1.msra.mxu0 %v417
    %469 = vmatprep.subr.mxu0 %v421
    %470 = vmatpush1.msra.mxu0 %v420
    %471 = vmatprep.subr.mxu0 %v424
    %472 = vmatpush1.msra.mxu0 %v423
    %473 = vmatprep.subr.mxu0 %v427
    %474 = vmatpush1.msra.mxu0 %v426
    %475 = vmatprep.subr.mxu0 %v430
    %476 = vmatpush1.msra.mxu0 %v429
    %477 = vmatprep.subr.mxu0 %v433
    %478 = vmatpush1.msra.mxu0 %v432
    %479 = vmatprep.subr.mxu0 %v436
    %480 = vmatpush1.msra.mxu0 %v435
    %481 = vmatprep.subr.mxu0 0.0
    %482 = vmatpush1.msra.mxu0 0.0
    %483 = vmatprep.subr.mxu0 0.0
    %484 = vmatpush1.msra.mxu0 0.0
    %485 = vmatprep.subr.mxu0 0.0
    %486 = vmatpush1.msra.mxu0 0.0
    %487 = vmatprep.subr.mxu0 0.0
    %488 = vmatpush1.msra.mxu0 0.0
    %489 = vmatprep.subr.mxu0 0.0
    %490 = vmatpush1.msra.mxu0 0.0
    %491 = vmatprep.subr.mxu0 0.0
    %492 = vmatpush1.msra.mxu0 0.0
    %493 = vmatprep.subr.mxu0 0.0
    %494 = vmatpush1.msra.mxu0 0.0
    %495 = vmatprep.subr.mxu0 0.0
    %496 = vmatpush1.msra.mxu0 0.0
    %497 = vmatprep.subr.mxu0 0.0
    %498 = vmatpush1.msra.mxu0 0.0
    %499 = vmatprep.subr.mxu0 0.0
    %500 = vmatpush1.msra.mxu0 0.0
    %501 = vmatprep.subr.mxu0 0.0
    %502 = vmatpush1.msra.mxu0 0.0
    %503 = vmatprep.subr.mxu0 0.0
    %504 = vmatpush1.msra.mxu0 0.0
    %505 = vmatprep.subr.mxu0 0.0
    %506 = vmatpush1.msra.mxu0 0.0
    %507 = vmatprep.subr.mxu0 0.0
    %508 = vmatpush1.msra.mxu0 0.0
    %509 = vmatprep.subr.mxu0 0.0
    %510 = vmatpush1.msra.mxu0 0.0
    %511 = vmatprep.subr.mxu0 0.0
    %512 = vmatpush1.msra.mxu0 0.0
    %513 = vmatprep.mubr.f32.mxu0 0.0
    %514 = vmatmul.mubr.f32.gmra.mrb[0].mxu0 %v441
    %v515 = vpop.f32.mrb[0].mxu0
    %v516 = vadd.f32 0.0, %v515
    %v517 = vpop.f32.mrb[0].mxu0
    %v518 = vadd.f32 0.0, %v517
    %519 = vdwg.mxu0
    %520 = vmatprep.subr.mxu0 0.0
    %521 = vmatpush1.msra.mxu0 %v392
    %522 = vmatprep.subr.mxu0 0.0
    %523 = vmatpush1.msra.mxu0 %v395
    %524 = vmatprep.subr.mxu0 0.0
    %525 = vmatpush1.msra.mxu0 %v398
    %526 = vmatprep.subr.mxu0 0.0
    %527 = vmatpush1.msra.mxu0 %v401
    %528 = vmatprep.subr.mxu0 0.0
    %529 = vmatpush1.msra.mxu0 %v404
    %530 = vmatprep.subr.mxu0 0.0
    %531 = vmatpush1.msra.mxu0 %v407
    %532 = vmatprep.subr.mxu0 0.0
    %533 = vmatpush1.msra.mxu0 %v410
    %534 = vmatprep.subr.mxu0 0.0
    %535 = vmatpush1.msra.mxu0 %v413
    %536 = vmatprep.subr.mxu0 0.0
    %537 = vmatpush1.msra.mxu0 %v416
    %538 = vmatprep.subr.mxu0 0.0
    %539 = vmatpush1.msra.mxu0 %v419
    %540 = vmatprep.subr.mxu0 0.0
    %541 = vmatpush1.msra.mxu0 %v422
    %542 = vmatprep.subr.mxu0 0.0
    %543 = vmatpush1.msra.mxu0 %v425
    %544 = vmatprep.subr.mxu0 0.0
    %545 = vmatpush1.msra.mxu0 %v428
    %546 = vmatprep.subr.mxu0 0.0
    %547 = vmatpush1.msra.mxu0 %v431
    %548 = vmatprep.subr.mxu0 0.0
    %549 = vmatpush1.msra.mxu0 %v434
    %550 = vmatprep.subr.mxu0 0.0
    %551 = vmatpush1.msra.mxu0 %v437
    %552 = vmatprep.subr.mxu0 0.0
    %553 = vmatpush1.msra.mxu0 0.0
    %554 = vmatprep.subr.mxu0 0.0
    %555 = vmatpush1.msra.mxu0 0.0
    %556 = vmatprep.subr.mxu0 0.0
    %557 = vmatpush1.msra.mxu0 0.0
    %558 = vmatprep.subr.mxu0 0.0
    %559 = vmatpush1.msra.mxu0 0.0
    %560 = vmatprep.subr.mxu0 0.0
    %561 = vmatpush1.msra.mxu0 0.0
    %562 = vmatprep.subr.mxu0 0.0
    %563 = vmatpush1.msra.mxu0 0.0
    %564 = vmatprep.subr.mxu0 0.0
    %565 = vmatpush1.msra.mxu0 0.0
    %566 = vmatprep.subr.mxu0 0.0
    %567 = vmatpush1.msra.mxu0 0.0
    %568 = vmatprep.subr.mxu0 0.0
    %569 = vmatpush1.msra.mxu0 0.0
    %570 = vmatprep.subr.mxu0 0.0
    %571 = vmatpush1.msra.mxu0 0.0
    %572 = vmatprep.subr.mxu0 0.0
    %573 = vmatpush1.msra.mxu0 0.0
    %574 = vmatprep.subr.mxu0 0.0
    %575 = vmatpush1.msra.mxu0 0.0
    %576 = vmatprep.subr.mxu0 0.0
    %577 = vmatpush1.msra.mxu0 0.0
    %578 = vmatprep.subr.mxu0 0.0
    %579 = vmatpush1.msra.mxu0 0.0
    %580 = vmatprep.subr.mxu0 0.0
    %581 = vmatpush1.msra.mxu0 0.0
    %582 = vmatprep.subr.mxu0 0.0
    %583 = vmatpush1.msra.mxu0 0.0
    %584 = vmatprep.mubr.f32.mxu0 0.0
    %585 = vmatmul.mubr.f32.gmra.mrb[0].mxu0 %v441
    %v586 = vpop.f32.mrb[0].mxu0
    %v587 = vadd.f32 0.0, %v586
    %v588 = vpop.f32.mrb[0].mxu0
    %589 = vdwg.mxu0
    %v590 = vadd.f32 %v446, %v516
    %v591 = vxor.u32 %v590, 2147483648
    %v592 = vmul.f32 %v591, 1.442695
    %v593 = vpow.pop %v592
    %v594 = vadd.f32 %v593, 1.0
    %v595 = vrcp.pop %v594
    %v596 = vmul.f32 1.0, %v595
    %v597 = vadd.f32 %v447, %v518
    %v598 = vxor.u32 %v597, 2147483648
    %v599 = vmul.f32 %v598, 1.442695
    %v600 = vpow.pop %v599
    %v601 = vadd.f32 %v600, 1.0
    %v602 = vrcp.pop %v601
    %v603 = vmul.f32 1.0, %v602
    %v605 = vlaneseq
    %v606 = vshrl.u32 %v605, 7
    %v607 = vsub.s32 0, %v606
    %v608 = vrot.slane %v438, %v607
    %v610 = vadd.f32 %v587, %v608
    %v611 = vmul.f32 %v596, %v610
    %v612 = vadd.f32 %v448, %v611
    %v613 = vtanh.pop %v612
    %v614 = vsub.f32 1.0, %v603
    %v615 = vmul.f32 %v614, %v613
    %v616 = vmul.f32 %v603, %v441
    %v617 = vadd.f32 %v615, %v616
    %s618 = sadd.s32 %s440, 1
    %v619 = vstv %s618
    %vm620 = vcmp.eq.s32.totalorder %v439, %v619
    %v621 = vsel %vm620, 1, 0
    %622 = vset.pattern.permute.xlu0 0
    %623 = vperm.xlu0 %622, %v621
    %v624 = vpop.permute.xlu0 %623
    %vm625 = vcmp.eq.s32.totalorder %v624, 1
    %v626 = vsel %vm625, %v617, %v442
    %s627 = smul.u32 1, 3
    %s628 = smul.addr %s627, 8
    %s629 = scalar_lea.vmem [#allocation2], %s628
    %v630 = vld [vmem:[%s629] sm:$0xff]
    %v631 = vld [vmem:[%s629 + $0x8] sm:$0xff]
    %v632 = vld [vmem:[%s629 + $0x10] sm:$0xff]
    %633 = vmatprep.subr.mxu0 %v391
    %634 = vmatpush1.msra.mxu0 %v390
    %635 = vmatprep.subr.mxu0 %v394
    %636 = vmatpush1.msra.mxu0 %v393
    %637 = vmatprep.subr.mxu0 %v397
    %638 = vmatpush1.msra.mxu0 %v396
    %639 = vmatprep.subr.mxu0 %v400
    %640 = vmatpush1.msra.mxu0 %v399
    %641 = vmatprep.subr.mxu0 %v403
    %642 = vmatpush1.msra.mxu0 %v402
    %643 = vmatprep.subr.mxu0 %v406
    %644 = vmatpush1.msra.mxu0 %v405
    %645 = vmatprep.subr.mxu0 %v409
    %646 = vmatpush1.msra.mxu0 %v408
    %647 = vmatprep.subr.mxu0 %v412
    %648 = vmatpush1.msra.mxu0 %v411
    %649 = vmatprep.subr.mxu0 %v415
    %650 = vmatpush1.msra.mxu0 %v414
    %651 = vmatprep.subr.mxu0 %v418
    %652 = vmatpush1.msra.mxu0 %v417
    %653 = vmatprep.subr.mxu0 %v421
    %654 = vmatpush1.msra.mxu0 %v420
    %655 = vmatprep.subr.mxu0 %v424
    %656 = vmatpush1.msra.mxu0 %v423
    %657 = vmatprep.subr.mxu0 %v427
    %658 = vmatpush1.msra.mxu0 %v426
    %659 = vmatprep.subr.mxu0 %v430
    %660 = vmatpush1.msra.mxu0 %v429
    %661 = vmatprep.subr.mxu0 %v433
    %662 = vmatpush1.msra.mxu0 %v432
    %663 = vmatprep.subr.mxu0 %v436
    %664 = vmatpush1.msra.mxu0 %v435
    %665 = vmatprep.subr.mxu0 0.0
    %666 = vmatpush1.msra.mxu0 0.0
    %667 = vmatprep.subr.mxu0 0.0
    %668 = vmatpush1.msra.mxu0 0.0
    %669 = vmatprep.subr.mxu0 0.0
    %670 = vmatpush1.msra.mxu0 0.0
    %671 = vmatprep.subr.mxu0 0.0
    %672 = vmatpush1.msra.mxu0 0.0
    %673 = vmatprep.subr.mxu0 0.0
    %674 = vmatpush1.msra.mxu0 0.0
    %675 = vmatprep.subr.mxu0 0.0
    %676 = vmatpush1.msra.mxu0 0.0
    %677 = vmatprep.subr.mxu0 0.0
    %678 = vmatpush1.msra.mxu0 0.0
    %679 = vmatprep.subr.mxu0 0.0
    %680 = vmatpush1.msra.mxu0 0.0
    %681 = vmatprep.subr.mxu0 0.0
    %682 = vmatpush1.msra.mxu0 0.0
    %683 = vmatprep.subr.mxu0 0.0
    %684 = vmatpush1.msra.mxu0 0.0
    %685 = vmatprep.subr.mxu0 0.0
    %686 = vmatpush1.msra.mxu0 0.0
    %687 = vmatprep.subr.mxu0 0.0
    %688 = vmatpush1.msra.mxu0 0.0
    %689 = vmatprep.subr.mxu0 0.0
    %690 = vmatpush1.msra.mxu0 0.0
    %691 = vmatprep.subr.mxu0 0.0
    %692 = vmatpush1.msra.mxu0 0.0
    %693 = vmatprep.subr.mxu0 0.0
    %694 = vmatpush1.msra.mxu0 0.0
    %695 = vmatprep.subr.mxu0 0.0
    %696 = vmatpush1.msra.mxu0 0.0
    %697 = vmatprep.mubr.f32.mxu0 0.0
    %698 = vmatmul.mubr.f32.gmra.mrb[0].mxu0 %v617
    %v699 = vpop.f32.mrb[0].mxu0
    %v700 = vadd.f32 0.0, %v699
    %v701 = vpop.f32.mrb[0].mxu0
    %v702 = vadd.f32 0.0, %v701
    %703 = vdwg.mxu0
    %704 = vmatprep.subr.mxu0 0.0
    %705 = vmatpush1.msra.mxu0 %v392
    %706 = vmatprep.subr.mxu0 0.0
    %707 = vmatpush1.msra.mxu0 %v395
    %708 = vmatprep.subr.mxu0 0.0
    %709 = vmatpush1.msra.mxu0 %v398
    %710 = vmatprep.subr.mxu0 0.0
    %711 = vmatpush1.msra.mxu0 %v401
    %712 = vmatprep.subr.mxu0 0.0
    %713 = vmatpush1.msra.mxu0 %v404
    %714 = vmatprep.subr.mxu0 0.0
    %715 = vmatpush1.msra.mxu0 %v407
    %716 = vmatprep.subr.mxu0 0.0
    %717 = vmatpush1.msra.mxu0 %v410
    %718 = vmatprep.subr.mxu0 0.0
    %719 = vmatpush1.msra.mxu0 %v413
    %720 = vmatprep.subr.mxu0 0.0
    %721 = vmatpush1.msra.mxu0 %v416
    %722 = vmatprep.subr.mxu0 0.0
    %723 = vmatpush1.msra.mxu0 %v419
    %724 = vmatprep.subr.mxu0 0.0
    %725 = vmatpush1.msra.mxu0 %v422
    %726 = vmatprep.subr.mxu0 0.0
    %727 = vmatpush1.msra.mxu0 %v425
    %728 = vmatprep.subr.mxu0 0.0
    %729 = vmatpush1.msra.mxu0 %v428
    %730 = vmatprep.subr.mxu0 0.0
    %731 = vmatpush1.msra.mxu0 %v431
    %732 = vmatprep.subr.mxu0 0.0
    %733 = vmatpush1.msra.mxu0 %v434
    %734 = vmatprep.subr.mxu0 0.0
    %735 = vmatpush1.msra.mxu0 %v437
    %736 = vmatprep.subr.mxu0 0.0
    %737 = vmatpush1.msra.mxu0 0.0
    %738 = vmatprep.subr.mxu0 0.0
    %739 = vmatpush1.msra.mxu0 0.0
    %740 = vmatprep.subr.mxu0 0.0
    %741 = vmatpush1.msra.mxu0 0.0
    %742 = vmatprep.subr.mxu0 0.0
    %743 = vmatpush1.msra.mxu0 0.0
    %744 = vmatprep.subr.mxu0 0.0
    %745 = vmatpush1.msra.mxu0 0.0
    %746 = vmatprep.subr.mxu0 0.0
    %747 = vmatpush1.msra.mxu0 0.0
    %748 = vmatprep.subr.mxu0 0.0
    %749 = vmatpush1.msra.mxu0 0.0
    %750 = vmatprep.subr.mxu0 0.0
    %751 = vmatpush1.msra.mxu0 0.0
    %752 = vmatprep.subr.mxu0 0.0
    %753 = vmatpush1.msra.mxu0 0.0
    %754 = vmatprep.subr.mxu0 0.0
    %755 = vmatpush1.msra.mxu0 0.0
    %756 = vmatprep.subr.mxu0 0.0
    %757 = vmatpush1.msra.mxu0 0.0
    %758 = vmatprep.subr.mxu0 0.0
    %759 = vmatpush1.msra.mxu0 0.0
    %760 = vmatprep.subr.mxu0 0.0
    %761 = vmatpush1.msra.mxu0 0.0
    %762 = vmatprep.subr.mxu0 0.0
    %763 = vmatpush1.msra.mxu0 0.0
    %764 = vmatprep.subr.mxu0 0.0
    %765 = vmatpush1.msra.mxu0 0.0
    %766 = vmatprep.subr.mxu0 0.0
    %767 = vmatpush1.msra.mxu0 0.0
    %768 = vmatprep.mubr.f32.mxu0 0.0
    %769 = vmatmul.mubr.f32.gmra.mrb[0].mxu0 %v617
    %v770 = vpop.f32.mrb[0].mxu0
    %v771 = vadd.f32 0.0, %v770
    %v772 = vpop.f32.mrb[0].mxu0
    %773 = vdwg.mxu0
    %v774 = vadd.f32 %v630, %v700
    %v775 = vxor.u32 %v774, 2147483648
    %v776 = vmul.f32 %v775, 1.442695
    %v777 = vpow.pop %v776
    %v778 = vadd.f32 %v777, 1.0
    %v779 = vrcp.pop %v778
    %v780 = vmul.f32 1.0, %v779
    %v781 = vadd.f32 %v631, %v702
    %v782 = vxor.u32 %v781, 2147483648
    %v783 = vmul.f32 %v782, 1.442695
    %v784 = vpow.pop %v783
    %v785 = vadd.f32 %v784, 1.0
    %v786 = vrcp.pop %v785
    %v787 = vmul.f32 1.0, %v786
    %v788 = vadd.f32 %v771, %v608
    %v789 = vmul.f32 %v780, %v788
    %v790 = vadd.f32 %v632, %v789
    %v791 = vtanh.pop %v790
    %v792 = vsub.f32 1.0, %v787
    %v793 = vmul.f32 %v792, %v791
    %v794 = vmul.f32 %v787, %v617
    %v795 = vadd.f32 %v793, %v794
    %s796 = sadd.s32 %s440, 2
    %v797 = vstv %s796
    %vm798 = vcmp.eq.s32.totalorder %v439, %v797
    %v799 = vsel %vm798, 1, 0
    %800 = vset.pattern.permute.xlu0 0
    %801 = vperm.xlu0 %800, %v799
    %v802 = vpop.permute.xlu0 %801
    %vm803 = vcmp.eq.s32.totalorder %v802, 1
    %v804 = vsel %vm803, %v795, %v626
    %s805 = smul.u32 2, 3
    %s806 = smul.addr %s805, 8
    %s807 = scalar_lea.vmem [#allocation2], %s806
    %v808 = vld [vmem:[%s807] sm:$0xff]
    %v809 = vld [vmem:[%s807 + $0x8] sm:$0xff]
    %v810 = vld [vmem:[%s807 + $0x10] sm:$0xff]
    %811 = vmatprep.subr.mxu0 %v391
    %812 = vmatpush1.msra.mxu0 %v390
    %813 = vmatprep.subr.mxu0 %v394
    %814 = vmatpush1.msra.mxu0 %v393
    %815 = vmatprep.subr.mxu0 %v397
    %816 = vmatpush1.msra.mxu0 %v396
    %817 = vmatprep.subr.mxu0 %v400
    %818 = vmatpush1.msra.mxu0 %v399
    %819 = vmatprep.subr.mxu0 %v403
    %820 = vmatpush1.msra.mxu0 %v402
    %821 = vmatprep.subr.mxu0 %v406
    %822 = vmatpush1.msra.mxu0 %v405
    %823 = vmatprep.subr.mxu0 %v409
    %824 = vmatpush1.msra.mxu0 %v408
    %825 = vmatprep.subr.mxu0 %v412
    %826 = vmatpush1.msra.mxu0 %v411
    %827 = vmatprep.subr.mxu0 %v415
    %828 = vmatpush1.msra.mxu0 %v414
    %829 = vmatprep.subr.mxu0 %v418
    %830 = vmatpush1.msra.mxu0 %v417
    %831 = vmatprep.subr.mxu0 %v421
    %832 = vmatpush1.msra.mxu0 %v420
    %833 = vmatprep.subr.mxu0 %v424
    %834 = vmatpush1.msra.mxu0 %v423
    %835 = vmatprep.subr.mxu0 %v427
    %836 = vmatpush1.msra.mxu0 %v426
    %837 = vmatprep.subr.mxu0 %v430
    %838 = vmatpush1.msra.mxu0 %v429
    %839 = vmatprep.subr.mxu0 %v433
    %840 = vmatpush1.msra.mxu0 %v432
    %841 = vmatprep.subr.mxu0 %v436
    %842 = vmatpush1.msra.mxu0 %v435
    %843 = vmatprep.subr.mxu0 0.0
    %844 = vmatpush1.msra.mxu0 0.0
    %845 = vmatprep.subr.mxu0 0.0
    %846 = vmatpush1.msra.mxu0 0.0
    %847 = vmatprep.subr.mxu0 0.0
    %848 = vmatpush1.msra.mxu0 0.0
    %849 = vmatprep.subr.mxu0 0.0
    %850 = vmatpush1.msra.mxu0 0.0
    %851 = vmatprep.subr.mxu0 0.0
    %852 = vmatpush1.msra.mxu0 0.0
    %853 = vmatprep.subr.mxu0 0.0
    %854 = vmatpush1.msra.mxu0 0.0
    %855 = vmatprep.subr.mxu0 0.0
    %856 = vmatpush1.msra.mxu0 0.0
    %857 = vmatprep.subr.mxu0 0.0
    %858 = vmatpush1.msra.mxu0 0.0
    %859 = vmatprep.subr.mxu0 0.0
    %860 = vmatpush1.msra.mxu0 0.0
    %861 = vmatprep.subr.mxu0 0.0
    %862 = vmatpush1.msra.mxu0 0.0
    %863 = vmatprep.subr.mxu0 0.0
    %864 = vmatpush1.msra.mxu0 0.0
    %865 = vmatprep.subr.mxu0 0.0
    %866 = vmatpush1.msra.mxu0 0.0
    %867 = vmatprep.subr.mxu0 0.0
    %868 = vmatpush1.msra.mxu0 0.0
    %869 = vmatprep.subr.mxu0 0.0
    %870 = vmatpush1.msra.mxu0 0.0
    %871 = vmatprep.subr.mxu0 0.0
    %872 = vmatpush1.msra.mxu0 0.0
    %873 = vmatprep.subr.mxu0 0.0
    %874 = vmatpush1.msra.mxu0 0.0
    %875 = vmatprep.mubr.f32.mxu0 0.0
    %876 = vmatmul.mubr.f32.gmra.mrb[0].mxu0 %v795
    %v877 = vpop.f32.mrb[0].mxu0
    %v878 = vadd.f32 0.0, %v877
    %v879 = vpop.f32.mrb[0].mxu0
    %v880 = vadd.f32 0.0, %v879
    %881 = vdwg.mxu0
    %882 = vmatprep.subr.mxu0 0.0
    %883 = vmatpush1.msra.mxu0 %v392
    %884 = vmatprep.subr.mxu0 0.0
    %885 = vmatpush1.msra.mxu0 %v395
    %886 = vmatprep.subr.mxu0 0.0
    %887 = vmatpush1.msra.mxu0 %v398
    %888 = vmatprep.subr.mxu0 0.0
    %889 = vmatpush1.msra.mxu0 %v401
    %890 = vmatprep.subr.mxu0 0.0
    %891 = vmatpush1.msra.mxu0 %v404
    %892 = vmatprep.subr.mxu0 0.0
    %893 = vmatpush1.msra.mxu0 %v407
    %894 = vmatprep.subr.mxu0 0.0
    %895 = vmatpush1.msra.mxu0 %v410
    %896 = vmatprep.subr.mxu0 0.0
    %897 = vmatpush1.msra.mxu0 %v413
    %898 = vmatprep.subr.mxu0 0.0
    %899 = vmatpush1.msra.mxu0 %v416
    %900 = vmatprep.subr.mxu0 0.0
    %901 = vmatpush1.msra.mxu0 %v419
    %902 = vmatprep.subr.mxu0 0.0
    %903 = vmatpush1.msra.mxu0 %v422
    %904 = vmatprep.subr.mxu0 0.0
    %905 = vmatpush1.msra.mxu0 %v425
    %906 = vmatprep.subr.mxu0 0.0
    %907 = vmatpush1.msra.mxu0 %v428
    %908 = vmatprep.subr.mxu0 0.0
    %909 = vmatpush1.msra.mxu0 %v431
    %910 = vmatprep.subr.mxu0 0.0
    %911 = vmatpush1.msra.mxu0 %v434
    %912 = vmatprep.subr.mxu0 0.0
    %913 = vmatpush1.msra.mxu0 %v437
    %914 = vmatprep.subr.mxu0 0.0
    %915 = vmatpush1.msra.mxu0 0.0
    %916 = vmatprep.subr.mxu0 0.0
    %917 = vmatpush1.msra.mxu0 0.0
    %918 = vmatprep.subr.mxu0 0.0
    %919 = vmatpush1.msra.mxu0 0.0
    %920 = vmatprep.subr.mxu0 0.0
    %921 = vmatpush1.msra.mxu0 0.0
    %922 = vmatprep.subr.mxu0 0.0
    %923 = vmatpush1.msra.mxu0 0.0
    %924 = vmatprep.subr.mxu0 0.0
    %925 = vmatpush1.msra.mxu0 0.0
    %926 = vmatprep.subr.mxu0 0.0
    %927 = vmatpush1.msra.mxu0 0.0
    %928 = vmatprep.subr.mxu0 0.0
    %929 = vmatpush1.msra.mxu0 0.0
    %930 = vmatprep.subr.mxu0 0.0
    %931 = vmatpush1.msra.mxu0 0.0
    %932 = vmatprep.subr.mxu0 0.0
    %933 = vmatpush1.msra.mxu0 0.0
    %934 = vmatprep.subr.mxu0 0.0
    %935 = vmatpush1.msra.mxu0 0.0
    %936 = vmatprep.subr.mxu0 0.0
    %937 = vmatpush1.msra.mxu0 0.0
    %938 = vmatprep.subr.mxu0 0.0
    %939 = vmatpush1.msra.mxu0 0.0
    %940 = vmatprep.subr.mxu0 0.0
    %941 = vmatpush1.msra.mxu0 0.0
    %942 = vmatprep.subr.mxu0 0.0
    %943 = vmatpush1.msra.mxu0 0.0
    %944 = vmatprep.subr.mxu0 0.0
    %945 = vmatpush1.msra.mxu0 0.0
    %946 = vmatprep.mubr.f32.mxu0 0.0
    %947 = vmatmul.mubr.f32.gmra.mrb[0].mxu0 %v795
    %v948 = vpop.f32.mrb[0].mxu0
    %v949 = vadd.f32 0.0, %v948
    %v950 = vpop.f32.mrb[0].mxu0
    %951 = vdwg.mxu0
    %v952 = vadd.f32 %v808, %v878
    %v953 = vxor.u32 %v952, 2147483648
    %v954 = vmul.f32 %v953, 1.442695
    %v955 = vpow.pop %v954
    %v956 = vadd.f32 %v955, 1.0
    %v957 = vrcp.pop %v956
    %v958 = vmul.f32 1.0, %v957
    %v959 = vadd.f32 %v809, %v880
    %v960 = vxor.u32 %v959, 2147483648
    %v961 = vmul.f32 %v960, 1.442695
    %v962 = vpow.pop %v961
    %v963 = vadd.f32 %v962, 1.0
    %v964 = vrcp.pop %v963
    %v965 = vmul.f32 1.0, %v964
    %v966 = vadd.f32 %v949, %v608
    %v967 = vmul.f32 %v958, %v966
    %v968 = vadd.f32 %v810, %v967
    %v969 = vtanh.pop %v968
    %v970 = vsub.f32 1.0, %v965
    %v971 = vmul.f32 %v970, %v969
    %v972 = vmul.f32 %v965, %v795
    %v973 = vadd.f32 %v971, %v972
    %s974 = sadd.s32 %s440, 3
    %v975 = vstv %s974
    %vm976 = vcmp.eq.s32.totalorder %v439, %v975
    %v977 = vsel %vm976, 1, 0
    %978 = vset.pattern.permute.xlu0 0
    %979 = vperm.xlu0 %978, %v977
    %v980 = vpop.permute.xlu0 %979
    %vm981 = vcmp.eq.s32.totalorder %v980, 1
    %v982 = vsel %vm981, %v973, %v804
    %s983 = smul.u32 3, 3
    %s984 = smul.addr %s983, 8
    %s985 = scalar_lea.vmem [#allocation2], %s984
    %v986 = vld [vmem:[%s985] sm:$0xff]
    %v987 = vld [vmem:[%s985 + $0x8] sm:$0xff]
    %v988 = vld [vmem:[%s985 + $0x10] sm:$0xff]
    %989 = vmatprep.subr.mxu0 %v391
    %990 = vmatpush1.msra.mxu0 %v390
    %991 = vmatprep.subr.mxu0 %v394
    %992 = vmatpush1.msra.mxu0 %v393
    %993 = vmatprep.subr.mxu0 %v397
    %994 = vmatpush1.msra.mxu0 %v396
    %995 = vmatprep.subr.mxu0 %v400
    %996 = vmatpush1.msra.mxu0 %v399
    %997 = vmatprep.subr.mxu0 %v403
    %998 = vmatpush1.msra.mxu0 %v402
    %999 = vmatprep.subr.mxu0 %v406
    %1000 = vmatpush1.msra.mxu0 %v405
    %1001 = vmatprep.subr.mxu0 %v409
    %1002 = vmatpush1.msra.mxu0 %v408
    %1003 = vmatprep.subr.mxu0 %v412
    %1004 = vmatpush1.msra.mxu0 %v411
    %1005 = vmatprep.subr.mxu0 %v415
    %1006 = vmatpush1.msra.mxu0 %v414
    %1007 = vmatprep.subr.mxu0 %v418
    %1008 = vmatpush1.msra.mxu0 %v417
    %1009 = vmatprep.subr.mxu0 %v421
    %1010 = vmatpush1.msra.mxu0 %v420
    %1011 = vmatprep.subr.mxu0 %v424
    %1012 = vmatpush1.msra.mxu0 %v423
    %1013 = vmatprep.subr.mxu0 %v427
    %1014 = vmatpush1.msra.mxu0 %v426
    %1015 = vmatprep.subr.mxu0 %v430
    %1016 = vmatpush1.msra.mxu0 %v429
    %1017 = vmatprep.subr.mxu0 %v433
    %1018 = vmatpush1.msra.mxu0 %v432
    %1019 = vmatprep.subr.mxu0 %v436
    %1020 = vmatpush1.msra.mxu0 %v435
    %1021 = vmatprep.subr.mxu0 0.0
    %1022 = vmatpush1.msra.mxu0 0.0
    %1023 = vmatprep.subr.mxu0 0.0
    %1024 = vmatpush1.msra.mxu0 0.0
    %1025 = vmatprep.subr.mxu0 0.0
    %1026 = vmatpush1.msra.mxu0 0.0
    %1027 = vmatprep.subr.mxu0 0.0
    %1028 = vmatpush1.msra.mxu0 0.0
    %1029 = vmatprep.subr.mxu0 0.0
    %1030 = vmatpush1.msra.mxu0 0.0
    %1031 = vmatprep.subr.mxu0 0.0
    %1032 = vmatpush1.msra.mxu0 0.0
    %1033 = vmatprep.subr.mxu0 0.0
    %1034 = vmatpush1.msra.mxu0 0.0
    %1035 = vmatprep.subr.mxu0 0.0
    %1036 = vmatpush1.msra.mxu0 0.0
    %1037 = vmatprep.subr.mxu0 0.0
    %1038 = vmatpush1.msra.mxu0 0.0
    %1039 = vmatprep.subr.mxu0 0.0
    %1040 = vmatpush1.msra.mxu0 0.0
    %1041 = vmatprep.subr.mxu0 0.0
    %1042 = vmatpush1.msra.mxu0 0.0
    %1043 = vmatprep.subr.mxu0 0.0
    %1044 = vmatpush1.msra.mxu0 0.0
    %1045 = vmatprep.subr.mxu0 0.0
    %1046 = vmatpush1.msra.mxu0 0.0
    %1047 = vmatprep.subr.mxu0 0.0
    %1048 = vmatpush1.msra.mxu0 0.0
    %1049 = vmatprep.subr.mxu0 0.0
    %1050 = vmatpush1.msra.mxu0 0.0
    %1051 = vmatprep.subr.mxu0 0.0
    %1052 = vmatpush1.msra.mxu0 0.0
    %1053 = vmatprep.mubr.f32.mxu0 0.0
    %1054 = vmatmul.mubr.f32.gmra.mrb[0].mxu0 %v973
    %v1055 = vpop.f32.mrb[0].mxu0
    %v1056 = vadd.f32 0.0, %v1055
    %v1057 = vpop.f32.mrb[0].mxu0
    %v1058 = vadd.f32 0.0, %v1057
    %1059 = vdwg.mxu0
    %1060 = vmatprep.subr.mxu0 0.0
    %1061 = vmatpush1.msra.mxu0 %v392
    %1062 = vmatprep.subr.mxu0 0.0
    %1063 = vmatpush1.msra.mxu0 %v395
    %1064 = vmatprep.subr.mxu0 0.0
    %1065 = vmatpush1.msra.mxu0 %v398
    %1066 = vmatprep.subr.mxu0 0.0
    %1067 = vmatpush1.msra.mxu0 %v401
    %1068 = vmatprep.subr.mxu0 0.0
    %1069 = vmatpush1.msra.mxu0 %v404
    %1070 = vmatprep.subr.mxu0 0.0
    %1071 = vmatpush1.msra.mxu0 %v407
    %1072 = vmatprep.subr.mxu0 0.0
    %1073 = vmatpush1.msra.mxu0 %v410
    %1074 = vmatprep.subr.mxu0 0.0
    %1075 = vmatpush1.msra.mxu0 %v413
    %1076 = vmatprep.subr.mxu0 0.0
    %1077 = vmatpush1.msra.mxu0 %v416
    %1078 = vmatprep.subr.mxu0 0.0
    %1079 = vmatpush1.msra.mxu0 %v419
    %1080 = vmatprep.subr.mxu0 0.0
    %1081 = vmatpush1.msra.mxu0 %v422
    %1082 = vmatprep.subr.mxu0 0.0
    %1083 = vmatpush1.msra.mxu0 %v425
    %1084 = vmatprep.subr.mxu0 0.0
    %1085 = vmatpush1.msra.mxu0 %v428
    %1086 = vmatprep.subr.mxu0 0.0
    %1087 = vmatpush1.msra.mxu0 %v431
    %1088 = vmatprep.subr.mxu0 0.0
    %1089 = vmatpush1.msra.mxu0 %v434
    %1090 = vmatprep.subr.mxu0 0.0
    %1091 = vmatpush1.msra.mxu0 %v437
    %1092 = vmatprep.subr.mxu0 0.0
    %1093 = vmatpush1.msra.mxu0 0.0
    %1094 = vmatprep.subr.mxu0 0.0
    %1095 = vmatpush1.msra.mxu0 0.0
    %1096 = vmatprep.subr.mxu0 0.0
    %1097 = vmatpush1.msra.mxu0 0.0
    %1098 = vmatprep.subr.mxu0 0.0
    %1099 = vmatpush1.msra.mxu0 0.0
    %1100 = vmatprep.subr.mxu0 0.0
    %1101 = vmatpush1.msra.mxu0 0.0
    %1102 = vmatprep.subr.mxu0 0.0
    %1103 = vmatpush1.msra.mxu0 0.0
    %1104 = vmatprep.subr.mxu0 0.0
    %1105 = vmatpush1.msra.mxu0 0.0
    %1106 = vmatprep.subr.mxu0 0.0
    %1107 = vmatpush1.msra.mxu0 0.0
    %1108 = vmatprep.subr.mxu0 0.0
    %1109 = vmatpush1.msra.mxu0 0.0
    %1110 = vmatprep.subr.mxu0 0.0
    %1111 = vmatpush1.msra.mxu0 0.0
    %1112 = vmatprep.subr.mxu0 0.0
    %1113 = vmatpush1.msra.mxu0 0.0
    %1114 = vmatprep.subr.mxu0 0.0
    %1115 = vmatpush1.msra.mxu0 0.0
    %1116 = vmatprep.subr.mxu0 0.0
    %1117 = vmatpush1.msra.mxu0 0.0
    %1118 = vmatprep.subr.mxu0 0.0
    %1119 = vmatpush1.msra.mxu0 0.0
    %1120 = vmatprep.subr.mxu0 0.0
    %1121 = vmatpush1.msra.mxu0 0.0
    %1122 = vmatprep.subr.mxu0 0.0
    %1123 = vmatpush1.msra.mxu0 0.0
    %1124 = vmatprep.mubr.f32.mxu0 0.0
    %1125 = vmatmul.mubr.f32.gmra.mrb[0].mxu0 %v973
    %v1126 = vpop.f32.mrb[0].mxu0
    %v1127 = vadd.f32 0.0, %v1126
    %v1128 = vpop.f32.mrb[0].mxu0
    %1129 = vdwg.mxu0
    %v1130 = vadd.f32 %v986, %v1056
    %v1131 = vxor.u32 %v1130, 2147483648
    %v1132 = vmul.f32 %v1131, 1.442695
    %v1133 = vpow.pop %v1132
    %v1134 = vadd.f32 %v1133, 1.0
    %v1135 = vrcp.pop %v1134
    %v1136 = vmul.f32 1.0, %v1135
    %v1137 = vadd.f32 %v987, %v1058
    %v1138 = vxor.u32 %v1137, 2147483648
    %v1139 = vmul.f32 %v1138, 1.442695
    %v1140 = vpow.pop %v1139
    %v1141 = vadd.f32 %v1140, 1.0
    %v1142 = vrcp.pop %v1141
    %v1143 = vmul.f32 1.0, %v1142
    %v1144 = vadd.f32 %v1127, %v608
    %v1145 = vmul.f32 %v1136, %v1144
    %v1146 = vadd.f32 %v988, %v1145
    %v1147 = vtanh.pop %v1146
    %v1148 = vsub.f32 1.0, %v1143
    %v1149 = vmul.f32 %v1148, %v1147
    %v1150 = vmul.f32 %v1143, %v973
    %v1151 = vadd.f32 %v1149, %v1150
    %s1152 = sadd.s32 %s440, 4
    %v1153 = vstv %s1152
    %vm1154 = vcmp.eq.s32.totalorder %v439, %v1153
    %v1155 = vsel %vm1154, 1, 0
    %1156 = vset.pattern.permute.xlu0 0
    %1157 = vperm.xlu0 %1156, %v1155
    %v1158 = vpop.permute.xlu0 %1157
    %vm1159 = vcmp.eq.s32.totalorder %v1158, 1
    %v1160 = vsel %vm1159, %v1151, %v982
    %s1161 = smul.u32 4, 3
    %s1162 = smul.addr %s1161, 8
    %s1163 = scalar_lea.vmem [#allocation2], %s1162
    %v1164 = vld [vmem:[%s1163] sm:$0xff]
    %v1165 = vld [vmem:[%s1163 + $0x8] sm:$0xff]
    %v1166 = vld [vmem:[%s1163 + $0x10] sm:$0xff]
    %1167 = vmatprep.subr.mxu0 %v391
    %1168 = vmatpush1.msra.mxu0 %v390
    %1169 = vmatprep.subr.mxu0 %v394
    %1170 = vmatpush1.msra.mxu0 %v393
    %1171 = vmatprep.subr.mxu0 %v397
    %1172 = vmatpush1.msra.mxu0 %v396
    %1173 = vmatprep.subr.mxu0 %v400
    %1174 = vmatpush1.msra.mxu0 %v399
    %1175 = vmatprep.subr.mxu0 %v403
    %1176 = vmatpush1.msra.mxu0 %v402
    %1177 = vmatprep.subr.mxu0 %v406
    %1178 = vmatpush1.msra.mxu0 %v405
    %1179 = vmatprep.subr.mxu0 %v409
    %1180 = vmatpush1.msra.mxu0 %v408
    %1181 = vmatprep.subr.mxu0 %v412
    %1182 = vmatpush1.msra.mxu0 %v411
    %1183 = vmatprep.subr.mxu0 %v415
    %1184 = vmatpush1.msra.mxu0 %v414
    %1185 = vmatprep.subr.mxu0 %v418
    %1186 = vmatpush1.msra.mxu0 %v417
    %1187 = vmatprep.subr.mxu0 %v421
    %1188 = vmatpush1.msra.mxu0 %v420
    %1189 = vmatprep.subr.mxu0 %v424
    %1190 = vmatpush1.msra.mxu0 %v423
    %1191 = vmatprep.subr.mxu0 %v427
    %1192 = vmatpush1.msra.mxu0 %v426
    %1193 = vmatprep.subr.mxu0 %v430
    %1194 = vmatpush1.msra.mxu0 %v429
    %1195 = vmatprep.subr.mxu0 %v433
    %1196 = vmatpush1.msra.mxu0 %v432
    %1197 = vmatprep.subr.mxu0 %v436
    %1198 = vmatpush1.msra.mxu0 %v435
    %1199 = vmatprep.subr.mxu0 0.0
    %1200 = vmatpush1.msra.mxu0 0.0
    %1201 = vmatprep.subr.mxu0 0.0
    %1202 = vmatpush1.msra.mxu0 0.0
    %1203 = vmatprep.subr.mxu0 0.0
    %1204 = vmatpush1.msra.mxu0 0.0
    %1205 = vmatprep.subr.mxu0 0.0
    %1206 = vmatpush1.msra.mxu0 0.0
    %1207 = vmatprep.subr.mxu0 0.0
    %1208 = vmatpush1.msra.mxu0 0.0
    %1209 = vmatprep.subr.mxu0 0.0
    %1210 = vmatpush1.msra.mxu0 0.0
    %1211 = vmatprep.subr.mxu0 0.0
    %1212 = vmatpush1.msra.mxu0 0.0
    %1213 = vmatprep.subr.mxu0 0.0
    %1214 = vmatpush1.msra.mxu0 0.0
    %1215 = vmatprep.subr.mxu0 0.0
    %1216 = vmatpush1.msra.mxu0 0.0
    %1217 = vmatprep.subr.mxu0 0.0
    %1218 = vmatpush1.msra.mxu0 0.0
    %1219 = vmatprep.subr.mxu0 0.0
    %1220 = vmatpush1.msra.mxu0 0.0
    %1221 = vmatprep.subr.mxu0 0.0
    %1222 = vmatpush1.msra.mxu0 0.0
    %1223 = vmatprep.subr.mxu0 0.0
    %1224 = vmatpush1.msra.mxu0 0.0
    %1225 = vmatprep.subr.mxu0 0.0
    %1226 = vmatpush1.msra.mxu0 0.0
    %1227 = vmatprep.subr.mxu0 0.0
    %1228 = vmatpush1.msra.mxu0 0.0
    %1229 = vmatprep.subr.mxu0 0.0
    %1230 = vmatpush1.msra.mxu0 0.0
    %1231 = vmatprep.mubr.f32.mxu0 0.0
    %1232 = vmatmul.mubr.f32.gmra.mrb[0].mxu0 %v1151
    %v1233 = vpop.f32.mrb[0].mxu0
    %v1234 = vadd.f32 0.0, %v1233
    %v1235 = vpop.f32.mrb[0].mxu0
    %v1236 = vadd.f32 0.0, %v1235
    %1237 = vdwg.mxu0
    %1238 = vmatprep.subr.mxu0 0.0
    %1239 = vmatpush1.msra.mxu0 %v392
    %1240 = vmatprep.subr.mxu0 0.0
    %1241 = vmatpush1.msra.mxu0 %v395
    %1242 = vmatprep.subr.mxu0 0.0
    %1243 = vmatpush1.msra.mxu0 %v398
    %1244 = vmatprep.subr.mxu0 0.0
    %1245 = vmatpush1.msra.mxu0 %v401
    %1246 = vmatprep.subr.mxu0 0.0
    %1247 = vmatpush1.msra.mxu0 %v404
    %1248 = vmatprep.subr.mxu0 0.0
    %1249 = vmatpush1.msra.mxu0 %v407
    %1250 = vmatprep.subr.mxu0 0.0
    %1251 = vmatpush1.msra.mxu0 %v410
    %1252 = vmatprep.subr.mxu0 0.0
    %1253 = vmatpush1.msra.mxu0 %v413
    %1254 = vmatprep.subr.mxu0 0.0
    %1255 = vmatpush1.msra.mxu0 %v416
    %1256 = vmatprep.subr.mxu0 0.0
    %1257 = vmatpush1.msra.mxu0 %v419
    %1258 = vmatprep.subr.mxu0 0.0
    %1259 = vmatpush1.msra.mxu0 %v422
    %1260 = vmatprep.subr.mxu0 0.0
    %1261 = vmatpush1.msra.mxu0 %v425
    %1262 = vmatprep.subr.mxu0 0.0
    %1263 = vmatpush1.msra.mxu0 %v428
    %1264 = vmatprep.subr.mxu0 0.0
    %1265 = vmatpush1.msra.mxu0 %v431
    %1266 = vmatprep.subr.mxu0 0.0
    %1267 = vmatpush1.msra.mxu0 %v434
    %1268 = vmatprep.subr.mxu0 0.0
    %1269 = vmatpush1.msra.mxu0 %v437
    %1270 = vmatprep.subr.mxu0 0.0
    %1271 = vmatpush1.msra.mxu0 0.0
    %1272 = vmatprep.subr.mxu0 0.0
    %1273 = vmatpush1.msra.mxu0 0.0
    %1274 = vmatprep.subr.mxu0 0.0
    %1275 = vmatpush1.msra.mxu0 0.0
    %1276 = vmatprep.subr.mxu0 0.0
    %1277 = vmatpush1.msra.mxu0 0.0
    %1278 = vmatprep.subr.mxu0 0.0
    %1279 = vmatpush1.msra.mxu0 0.0
    %1280 = vmatprep.subr.mxu0 0.0
    %1281 = vmatpush1.msra.mxu0 0.0
    %1282 = vmatprep.subr.mxu0 0.0
    %1283 = vmatpush1.msra.mxu0 0.0
    %1284 = vmatprep.subr.mxu0 0.0
    %1285 = vmatpush1.msra.mxu0 0.0
    %1286 = vmatprep.subr.mxu0 0.0
    %1287 = vmatpush1.msra.mxu0 0.0
    %1288 = vmatprep.subr.mxu0 0.0
    %1289 = vmatpush1.msra.mxu0 0.0
    %1290 = vmatprep.subr.mxu0 0.0
    %1291 = vmatpush1.msra.mxu0 0.0
    %1292 = vmatprep.subr.mxu0 0.0
    %1293 = vmatpush1.msra.mxu0 0.0
    %1294 = vmatprep.subr.mxu0 0.0
    %1295 = vmatpush1.msra.mxu0 0.0
    %1296 = vmatprep.subr.mxu0 0.0
    %1297 = vmatpush1.msra.mxu0 0.0
    %1298 = vmatprep.subr.mxu0 0.0
    %1299 = vmatpush1.msra.mxu0 0.0
    %1300 = vmatprep.subr.mxu0 0.0
    %1301 = vmatpush1.msra.mxu0 0.0
    %1302 = vmatprep.mubr.f32.mxu0 0.0
    %1303 = vmatmul.mubr.f32.gmra.mrb[0].mxu0 %v1151
    %v1304 = vpop.f32.mrb[0].mxu0
    %v1305 = vadd.f32 0.0, %v1304
    %v1306 = vpop.f32.mrb[0].mxu0
    %1307 = vdwg.mxu0
    %v1308 = vadd.f32 %v1164, %v1234
    %v1309 = vxor.u32 %v1308, 2147483648
    %v1310 = vmul.f32 %v1309, 1.442695
    %v1311 = vpow.pop %v1310
    %v1312 = vadd.f32 %v1311, 1.0
    %v1313 = vrcp.pop %v1312
    %v1314 = vmul.f32 1.0, %v1313
    %v1315 = vadd.f32 %v1165, %v1236
    %v1316 = vxor.u32 %v1315, 2147483648
    %v1317 = vmul.f32 %v1316, 1.442695
    %v1318 = vpow.pop %v1317
    %v1319 = vadd.f32 %v1318, 1.0
    %v1320 = vrcp.pop %v1319
    %v1321 = vmul.f32 1.0, %v1320
    %v1322 = vadd.f32 %v1305, %v608
    %v1323 = vmul.f32 %v1314, %v1322
    %v1324 = vadd.f32 %v1166, %v1323
    %v1325 = vtanh.pop %v1324
    %v1326 = vsub.f32 1.0, %v1321
    %v1327 = vmul.f32 %v1326, %v1325
    %v1328 = vmul.f32 %v1321, %v1151
    %v1329 = vadd.f32 %v1327, %v1328
    %s1330 = sadd.s32 %s440, 5
    %v1331 = vstv %s1330
    %vm1332 = vcmp.eq.s32.totalorder %v439, %v1331
    %v1333 = vsel %vm1332, 1, 0
    %1334 = vset.pattern.permute.xlu0 0
    %1335 = vperm.xlu0 %1334, %v1333
    %v1336 = vpop.permute.xlu0 %1335
    %vm1337 = vcmp.eq.s32.totalorder %v1336, 1
    %v1338 = vsel %vm1337, %v1329, %v1160
    %s1339 = smul.u32 5, 3
    %s1340 = smul.addr %s1339, 8
    %s1341 = scalar_lea.vmem [#allocation2], %s1340
    %v1342 = vld [vmem:[%s1341] sm:$0xff]
    %v1343 = vld [vmem:[%s1341 + $0x8] sm:$0xff]
    %v1344 = vld [vmem:[%s1341 + $0x10] sm:$0xff]
    %1345 = vmatprep.subr.mxu0 %v391
    %1346 = vmatpush1.msra.mxu0 %v390
    %1347 = vmatprep.subr.mxu0 %v394
    %1348 = vmatpush1.msra.mxu0 %v393
    %1349 = vmatprep.subr.mxu0 %v397
    %1350 = vmatpush1.msra.mxu0 %v396
    %1351 = vmatprep.subr.mxu0 %v400
    %1352 = vmatpush1.msra.mxu0 %v399
    %1353 = vmatprep.subr.mxu0 %v403
    %1354 = vmatpush1.msra.mxu0 %v402
    %1355 = vmatprep.subr.mxu0 %v406
    %1356 = vmatpush1.msra.mxu0 %v405
    %1357 = vmatprep.subr.mxu0 %v409
    %1358 = vmatpush1.msra.mxu0 %v408
    %1359 = vmatprep.subr.mxu0 %v412
    %1360 = vmatpush1.msra.mxu0 %v411
    %1361 = vmatprep.subr.mxu0 %v415
    %1362 = vmatpush1.msra.mxu0 %v414
    %1363 = vmatprep.subr.mxu0 %v418
    %1364 = vmatpush1.msra.mxu0 %v417
    %1365 = vmatprep.subr.mxu0 %v421
    %1366 = vmatpush1.msra.mxu0 %v420
    %1367 = vmatprep.subr.mxu0 %v424
    %1368 = vmatpush1.msra.mxu0 %v423
    %1369 = vmatprep.subr.mxu0 %v427
    %1370 = vmatpush1.msra.mxu0 %v426
    %1371 = vmatprep.subr.mxu0 %v430
    %1372 = vmatpush1.msra.mxu0 %v429
    %1373 = vmatprep.subr.mxu0 %v433
    %1374 = vmatpush1.msra.mxu0 %v432
    %1375 = vmatprep.subr.mxu0 %v436
    %1376 = vmatpush1.msra.mxu0 %v435
    %1377 = vmatprep.subr.mxu0 0.0
    %1378 = vmatpush1.msra.mxu0 0.0
    %1379 = vmatprep.subr.mxu0 0.0
    %1380 = vmatpush1.msra.mxu0 0.0
    %1381 = vmatprep.subr.mxu0 0.0
    %1382 = vmatpush1.msra.mxu0 0.0
    %1383 = vmatprep.subr.mxu0 0.0
    %1384 = vmatpush1.msra.mxu0 0.0
    %1385 = vmatprep.subr.mxu0 0.0
    %1386 = vmatpush1.msra.mxu0 0.0
    %1387 = vmatprep.subr.mxu0 0.0
    %1388 = vmatpush1.msra.mxu0 0.0
    %1389 = vmatprep.subr.mxu0 0.0
    %1390 = vmatpush1.msra.mxu0 0.0
    %1391 = vmatprep.subr.mxu0 0.0
    %1392 = vmatpush1.msra.mxu0 0.0
    %1393 = vmatprep.subr.mxu0 0.0
    %1394 = vmatpush1.msra.mxu0 0.0
    %1395 = vmatprep.subr.mxu0 0.0
    %1396 = vmatpush1.msra.mxu0 0.0
    %1397 = vmatprep.subr.mxu0 0.0
    %1398 = vmatpush1.msra.mxu0 0.0
    %1399 = vmatprep.subr.mxu0 0.0
    %1400 = vmatpush1.msra.mxu0 0.0
    %1401 = vmatprep.subr.mxu0 0.0
    %1402 = vmatpush1.msra.mxu0 0.0
    %1403 = vmatprep.subr.mxu0 0.0
    %1404 = vmatpush1.msra.mxu0 0.0
    %1405 = vmatprep.subr.mxu0 0.0
    %1406 = vmatpush1.msra.mxu0 0.0
    %1407 = vmatprep.subr.mxu0 0.0
    %1408 = vmatpush1.msra.mxu0 0.0
    %1409 = vmatprep.mubr.f32.mxu0 0.0
    %1410 = vmatmul.mubr.f32.gmra.mrb[0].mxu0 %v1329
    %v1411 = vpop.f32.mrb[0].mxu0
    %v1412 = vadd.f32 0.0, %v1411
    %v1413 = vpop.f32.mrb[0].mxu0
    %v1414 = vadd.f32 0.0, %v1413
    %1415 = vdwg.mxu0
    %1416 = vmatprep.subr.mxu0 0.0
    %1417 = vmatpush1.msra.mxu0 %v392
    %1418 = vmatprep.subr.mxu0 0.0
    %1419 = vmatpush1.msra.mxu0 %v395
    %1420 = vmatprep.subr.mxu0 0.0
    %1421 = vmatpush1.msra.mxu0 %v398
    %1422 = vmatprep.subr.mxu0 0.0
    %1423 = vmatpush1.msra.mxu0 %v401
    %1424 = vmatprep.subr.mxu0 0.0
    %1425 = vmatpush1.msra.mxu0 %v404
    %1426 = vmatprep.subr.mxu0 0.0
    %1427 = vmatpush1.msra.mxu0 %v407
    %1428 = vmatprep.subr.mxu0 0.0
    %1429 = vmatpush1.msra.mxu0 %v410
    %1430 = vmatprep.subr.mxu0 0.0
    %1431 = vmatpush1.msra.mxu0 %v413
    %1432 = vmatprep.subr.mxu0 0.0
    %1433 = vmatpush1.msra.mxu0 %v416
    %1434 = vmatprep.subr.mxu0 0.0
    %1435 = vmatpush1.msra.mxu0 %v419
    %1436 = vmatprep.subr.mxu0 0.0
    %1437 = vmatpush1.msra.mxu0 %v422
    %1438 = vmatprep.subr.mxu0 0.0
    %1439 = vmatpush1.msra.mxu0 %v425
    %1440 = vmatprep.subr.mxu0 0.0
    %1441 = vmatpush1.msra.mxu0 %v428
    %1442 = vmatprep.subr.mxu0 0.0
    %1443 = vmatpush1.msra.mxu0 %v431
    %1444 = vmatprep.subr.mxu0 0.0
    %1445 = vmatpush1.msra.mxu0 %v434
    %1446 = vmatprep.subr.mxu0 0.0
    %1447 = vmatpush1.msra.mxu0 %v437
    %1448 = vmatprep.subr.mxu0 0.0
    %1449 = vmatpush1.msra.mxu0 0.0
    %1450 = vmatprep.subr.mxu0 0.0
    %1451 = vmatpush1.msra.mxu0 0.0
    %1452 = vmatprep.subr.mxu0 0.0
    %1453 = vmatpush1.msra.mxu0 0.0
    %1454 = vmatprep.subr.mxu0 0.0
    %1455 = vmatpush1.msra.mxu0 0.0
    %1456 = vmatprep.subr.mxu0 0.0
    %1457 = vmatpush1.msra.mxu0 0.0
    %1458 = vmatprep.subr.mxu0 0.0
    %1459 = vmatpush1.msra.mxu0 0.0
    %1460 = vmatprep.subr.mxu0 0.0
    %1461 = vmatpush1.msra.mxu0 0.0
    %1462 = vmatprep.subr.mxu0 0.0
    %1463 = vmatpush1.msra.mxu0 0.0
    %1464 = vmatprep.subr.mxu0 0.0
    %1465 = vmatpush1.msra.mxu0 0.0
    %1466 = vmatprep.subr.mxu0 0.0
    %1467 = vmatpush1.msra.mxu0 0.0
    %1468 = vmatprep.subr.mxu0 0.0
    %1469 = vmatpush1.msra.mxu0 0.0
    %1470 = vmatprep.subr.mxu0 0.0
    %1471 = vmatpush1.msra.mxu0 0.0
    %1472 = vmatprep.subr.mxu0 0.0
    %1473 = vmatpush1.msra.mxu0 0.0
    %1474 = vmatprep.subr.mxu0 0.0
    %1475 = vmatpush1.msra.mxu0 0.0
    %1476 = vmatprep.subr.mxu0 0.0
    %1477 = vmatpush1.msra.mxu0 0.0
    %1478 = vmatprep.subr.mxu0 0.0
    %1479 = vmatpush1.msra.mxu0 0.0
    %1480 = vmatprep.mubr.f32.mxu0 0.0
    %1481 = vmatmul.mubr.f32.gmra.mrb[0].mxu0 %v1329
    %v1482 = vpop.f32.mrb[0].mxu0
    %v1483 = vadd.f32 0.0, %v1482
    %v1484 = vpop.f32.mrb[0].mxu0
    %1485 = vdwg.mxu0
    %v1486 = vadd.f32 %v1342, %v1412
    %v1487 = vxor.u32 %v1486, 2147483648
    %v1488 = vmul.f32 %v1487, 1.442695
    %v1489 = vpow.pop %v1488
    %v1490 = vadd.f32 %v1489, 1.0
    %v1491 = vrcp.pop %v1490
    %v1492 = vmul.f32 1.0, %v1491
    %v1493 = vadd.f32 %v1343, %v1414
    %v1494 = vxor.u32 %v1493, 2147483648
    %v1495 = vmul.f32 %v1494, 1.442695
    %v1496 = vpow.pop %v1495
    %v1497 = vadd.f32 %v1496, 1.0
    %v1498 = vrcp.pop %v1497
    %v1499 = vmul.f32 1.0, %v1498
    %v1500 = vadd.f32 %v1483, %v608
    %v1501 = vmul.f32 %v1492, %v1500
    %v1502 = vadd.f32 %v1344, %v1501
    %v1503 = vtanh.pop %v1502
    %v1504 = vsub.f32 1.0, %v1499
    %v1505 = vmul.f32 %v1504, %v1503
    %v1506 = vmul.f32 %v1499, %v1329
    %v1507 = vadd.f32 %v1505, %v1506
    %s1508 = sadd.s32 %s440, 6
    %v1509 = vstv %s1508
    %vm1510 = vcmp.eq.s32.totalorder %v439, %v1509
    %v1511 = vsel %vm1510, 1, 0
    %1512 = vset.pattern.permute.xlu0 0
    %1513 = vperm.xlu0 %1512, %v1511
    %v1514 = vpop.permute.xlu0 %1513
    %vm1515 = vcmp.eq.s32.totalorder %v1514, 1
    %v1516 = vsel %vm1515, %v1507, %v1338
    %s1517 = smul.u32 6, 3
    %s1518 = smul.addr %s1517, 8
    %s1519 = scalar_lea.vmem [#allocation2], %s1518
    %v1520 = vld [vmem:[%s1519] sm:$0xff]
    %v1521 = vld [vmem:[%s1519 + $0x8] sm:$0xff]
    %v1522 = vld [vmem:[%s1519 + $0x10] sm:$0xff]
    %1523 = vmatprep.subr.mxu0 %v391
    %1524 = vmatpush1.msra.mxu0 %v390
    %1525 = vmatprep.subr.mxu0 %v394
    %1526 = vmatpush1.msra.mxu0 %v393
    %1527 = vmatprep.subr.mxu0 %v397
    %1528 = vmatpush1.msra.mxu0 %v396
    %1529 = vmatprep.subr.mxu0 %v400
    %1530 = vmatpush1.msra.mxu0 %v399
    %1531 = vmatprep.subr.mxu0 %v403
    %1532 = vmatpush1.msra.mxu0 %v402
    %1533 = vmatprep.subr.mxu0 %v406
    %1534 = vmatpush1.msra.mxu0 %v405
    %1535 = vmatprep.subr.mxu0 %v409
    %1536 = vmatpush1.msra.mxu0 %v408
    %1537 = vmatprep.subr.mxu0 %v412
    %1538 = vmatpush1.msra.mxu0 %v411
    %1539 = vmatprep.subr.mxu0 %v415
    %1540 = vmatpush1.msra.mxu0 %v414
    %1541 = vmatprep.subr.mxu0 %v418
    %1542 = vmatpush1.msra.mxu0 %v417
    %1543 = vmatprep.subr.mxu0 %v421
    %1544 = vmatpush1.msra.mxu0 %v420
    %1545 = vmatprep.subr.mxu0 %v424
    %1546 = vmatpush1.msra.mxu0 %v423
    %1547 = vmatprep.subr.mxu0 %v427
    %1548 = vmatpush1.msra.mxu0 %v426
    %1549 = vmatprep.subr.mxu0 %v430
    %1550 = vmatpush1.msra.mxu0 %v429
    %1551 = vmatprep.subr.mxu0 %v433
    %1552 = vmatpush1.msra.mxu0 %v432
    %1553 = vmatprep.subr.mxu0 %v436
    %1554 = vmatpush1.msra.mxu0 %v435
    %1555 = vmatprep.subr.mxu0 0.0
    %1556 = vmatpush1.msra.mxu0 0.0
    %1557 = vmatprep.subr.mxu0 0.0
    %1558 = vmatpush1.msra.mxu0 0.0
    %1559 = vmatprep.subr.mxu0 0.0
    %1560 = vmatpush1.msra.mxu0 0.0
    %1561 = vmatprep.subr.mxu0 0.0
    %1562 = vmatpush1.msra.mxu0 0.0
    %1563 = vmatprep.subr.mxu0 0.0
    %1564 = vmatpush1.msra.mxu0 0.0
    %1565 = vmatprep.subr.mxu0 0.0
    %1566 = vmatpush1.msra.mxu0 0.0
    %1567 = vmatprep.subr.mxu0 0.0
    %1568 = vmatpush1.msra.mxu0 0.0
    %1569 = vmatprep.subr.mxu0 0.0
    %1570 = vmatpush1.msra.mxu0 0.0
    %1571 = vmatprep.subr.mxu0 0.0
    %1572 = vmatpush1.msra.mxu0 0.0
    %1573 = vmatprep.subr.mxu0 0.0
    %1574 = vmatpush1.msra.mxu0 0.0
    %1575 = vmatprep.subr.mxu0 0.0
    %1576 = vmatpush1.msra.mxu0 0.0
    %1577 = vmatprep.subr.mxu0 0.0
    %1578 = vmatpush1.msra.mxu0 0.0
    %1579 = vmatprep.subr.mxu0 0.0
    %1580 = vmatpush1.msra.mxu0 0.0
    %1581 = vmatprep.subr.mxu0 0.0
    %1582 = vmatpush1.msra.mxu0 0.0
    %1583 = vmatprep.subr.mxu0 0.0
    %1584 = vmatpush1.msra.mxu0 0.0
    %1585 = vmatprep.subr.mxu0 0.0
    %1586 = vmatpush1.msra.mxu0 0.0
    %1587 = vmatprep.mubr.f32.mxu0 0.0
    %1588 = vmatmul.mubr.f32.gmra.mrb[0].mxu0 %v1507
    %v1589 = vpop.f32.mrb[0].mxu0
    %v1590 = vadd.f32 0.0, %v1589
    %v1591 = vpop.f32.mrb[0].mxu0
    %v1592 = vadd.f32 0.0, %v1591
    %1593 = vdwg.mxu0
    %1594 = vmatprep.subr.mxu0 0.0
    %1595 = vmatpush1.msra.mxu0 %v392
    %1596 = vmatprep.subr.mxu0 0.0
    %1597 = vmatpush1.msra.mxu0 %v395
    %1598 = vmatprep.subr.mxu0 0.0
    %1599 = vmatpush1.msra.mxu0 %v398
    %1600 = vmatprep.subr.mxu0 0.0
    %1601 = vmatpush1.msra.mxu0 %v401
    %1602 = vmatprep.subr.mxu0 0.0
    %1603 = vmatpush1.msra.mxu0 %v404
    %1604 = vmatprep.subr.mxu0 0.0
    %1605 = vmatpush1.msra.mxu0 %v407
    %1606 = vmatprep.subr.mxu0 0.0
    %1607 = vmatpush1.msra.mxu0 %v410
    %1608 = vmatprep.subr.mxu0 0.0
    %1609 = vmatpush1.msra.mxu0 %v413
    %1610 = vmatprep.subr.mxu0 0.0
    %1611 = vmatpush1.msra.mxu0 %v416
    %1612 = vmatprep.subr.mxu0 0.0
    %1613 = vmatpush1.msra.mxu0 %v419
    %1614 = vmatprep.subr.mxu0 0.0
    %1615 = vmatpush1.msra.mxu0 %v422
    %1616 = vmatprep.subr.mxu0 0.0
    %1617 = vmatpush1.msra.mxu0 %v425
    %1618 = vmatprep.subr.mxu0 0.0
    %1619 = vmatpush1.msra.mxu0 %v428
    %1620 = vmatprep.subr.mxu0 0.0
    %1621 = vmatpush1.msra.mxu0 %v431
    %1622 = vmatprep.subr.mxu0 0.0
    %1623 = vmatpush1.msra.mxu0 %v434
    %1624 = vmatprep.subr.mxu0 0.0
    %1625 = vmatpush1.msra.mxu0 %v437
    %1626 = vmatprep.subr.mxu0 0.0
    %1627 = vmatpush1.msra.mxu0 0.0
    %1628 = vmatprep.subr.mxu0 0.0
    %1629 = vmatpush1.msra.mxu0 0.0
    %1630 = vmatprep.subr.mxu0 0.0
    %1631 = vmatpush1.msra.mxu0 0.0
    %1632 = vmatprep.subr.mxu0 0.0
    %1633 = vmatpush1.msra.mxu0 0.0
    %1634 = vmatprep.subr.mxu0 0.0
    %1635 = vmatpush1.msra.mxu0 0.0
    %1636 = vmatprep.subr.mxu0 0.0
    %1637 = vmatpush1.msra.mxu0 0.0
    %1638 = vmatprep.subr.mxu0 0.0
    %1639 = vmatpush1.msra.mxu0 0.0
    %1640 = vmatprep.subr.mxu0 0.0
    %1641 = vmatpush1.msra.mxu0 0.0
    %1642 = vmatprep.subr.mxu0 0.0
    %1643 = vmatpush1.msra.mxu0 0.0
    %1644 = vmatprep.subr.mxu0 0.0
    %1645 = vmatpush1.msra.mxu0 0.0
    %1646 = vmatprep.subr.mxu0 0.0
    %1647 = vmatpush1.msra.mxu0 0.0
    %1648 = vmatprep.subr.mxu0 0.0
    %1649 = vmatpush1.msra.mxu0 0.0
    %1650 = vmatprep.subr.mxu0 0.0
    %1651 = vmatpush1.msra.mxu0 0.0
    %1652 = vmatprep.subr.mxu0 0.0
    %1653 = vmatpush1.msra.mxu0 0.0
    %1654 = vmatprep.subr.mxu0 0.0
    %1655 = vmatpush1.msra.mxu0 0.0
    %1656 = vmatprep.subr.mxu0 0.0
    %1657 = vmatpush1.msra.mxu0 0.0
    %1658 = vmatprep.mubr.f32.mxu0 0.0
    %1659 = vmatmul.mubr.f32.gmra.mrb[0].mxu0 %v1507
    %v1660 = vpop.f32.mrb[0].mxu0
    %v1661 = vadd.f32 0.0, %v1660
    %v1662 = vpop.f32.mrb[0].mxu0
    %1663 = vdwg.mxu0
    %v1664 = vadd.f32 %v1520, %v1590
    %v1665 = vxor.u32 %v1664, 2147483648
    %v1666 = vmul.f32 %v1665, 1.442695
    %v1667 = vpow.pop %v1666
    %v1668 = vadd.f32 %v1667, 1.0
    %v1669 = vrcp.pop %v1668
    %v1670 = vmul.f32 1.0, %v1669
    %v1671 = vadd.f32 %v1521, %v1592
    %v1672 = vxor.u32 %v1671, 2147483648
    %v1673 = vmul.f32 %v1672, 1.442695
    %v1674 = vpow.pop %v1673
    %v1675 = vadd.f32 %v1674, 1.0
    %v1676 = vrcp.pop %v1675
    %v1677 = vmul.f32 1.0, %v1676
    %v1678 = vadd.f32 %v1661, %v608
    %v1679 = vmul.f32 %v1670, %v1678
    %v1680 = vadd.f32 %v1522, %v1679
    %v1681 = vtanh.pop %v1680
    %v1682 = vsub.f32 1.0, %v1677
    %v1683 = vmul.f32 %v1682, %v1681
    %v1684 = vmul.f32 %v1677, %v1507
    %v1685 = vadd.f32 %v1683, %v1684
    %s1686 = sadd.s32 %s440, 7
    %v1687 = vstv %s1686
    %vm1688 = vcmp.eq.s32.totalorder %v439, %v1687
    %v1689 = vsel %vm1688, 1, 0
    %1690 = vset.pattern.permute.xlu0 0
    %1691 = vperm.xlu0 %1690, %v1689
    %v1692 = vpop.permute.xlu0 %1691
    %vm1693 = vcmp.eq.s32.totalorder %v1692, 1
    %v1694 = vsel %vm1693, %v1685, %v1516
    %s1695 = smul.u32 7, 3
    %s1696 = smul.addr %s1695, 8
    %s1697 = scalar_lea.vmem [#allocation2], %s1696
    %v1698 = vld [vmem:[%s1697] sm:$0xff]
    %v1699 = vld [vmem:[%s1697 + $0x8] sm:$0xff]
    %v1700 = vld [vmem:[%s1697 + $0x10] sm:$0xff]
    %1701 = vmatprep.subr.mxu0 %v391
    %1702 = vmatpush1.msra.mxu0 %v390
    %1703 = vmatprep.subr.mxu0 %v394
    %1704 = vmatpush1.msra.mxu0 %v393
    %1705 = vmatprep.subr.mxu0 %v397
    %1706 = vmatpush1.msra.mxu0 %v396
    %1707 = vmatprep.subr.mxu0 %v400
    %1708 = vmatpush1.msra.mxu0 %v399
    %1709 = vmatprep.subr.mxu0 %v403
    %1710 = vmatpush1.msra.mxu0 %v402
    %1711 = vmatprep.subr.mxu0 %v406
    %1712 = vmatpush1.msra.mxu0 %v405
    %1713 = vmatprep.subr.mxu0 %v409
    %1714 = vmatpush1.msra.mxu0 %v408
    %1715 = vmatprep.subr.mxu0 %v412
    %1716 = vmatpush1.msra.mxu0 %v411
    %1717 = vmatprep.subr.mxu0 %v415
    %1718 = vmatpush1.msra.mxu0 %v414
    %1719 = vmatprep.subr.mxu0 %v418
    %1720 = vmatpush1.msra.mxu0 %v417
    %1721 = vmatprep.subr.mxu0 %v421
    %1722 = vmatpush1.msra.mxu0 %v420
    %1723 = vmatprep.subr.mxu0 %v424
    %1724 = vmatpush1.msra.mxu0 %v423
    %1725 = vmatprep.subr.mxu0 %v427
    %1726 = vmatpush1.msra.mxu0 %v426
    %1727 = vmatprep.subr.mxu0 %v430
    %1728 = vmatpush1.msra.mxu0 %v429
    %1729 = vmatprep.subr.mxu0 %v433
    %1730 = vmatpush1.msra.mxu0 %v432
    %1731 = vmatprep.subr.mxu0 %v436
    %1732 = vmatpush1.msra.mxu0 %v435
    %1733 = vmatprep.subr.mxu0 0.0
    %1734 = vmatpush1.msra.mxu0 0.0
    %1735 = vmatprep.subr.mxu0 0.0
    %1736 = vmatpush1.msra.mxu0 0.0
    %1737 = vmatprep.subr.mxu0 0.0
    %1738 = vmatpush1.msra.mxu0 0.0
    %1739 = vmatprep.subr.mxu0 0.0
    %1740 = vmatpush1.msra.mxu0 0.0
    %1741 = vmatprep.subr.mxu0 0.0
    %1742 = vmatpush1.msra.mxu0 0.0
    %1743 = vmatprep.subr.mxu0 0.0
    %1744 = vmatpush1.msra.mxu0 0.0
    %1745 = vmatprep.subr.mxu0 0.0
    %1746 = vmatpush1.msra.mxu0 0.0
    %1747 = vmatprep.subr.mxu0 0.0
    %1748 = vmatpush1.msra.mxu0 0.0
    %1749 = vmatprep.subr.mxu0 0.0
    %1750 = vmatpush1.msra.mxu0 0.0
    %1751 = vmatprep.subr.mxu0 0.0
    %1752 = vmatpush1.msra.mxu0 0.0
    %1753 = vmatprep.subr.mxu0 0.0
    %1754 = vmatpush1.msra.mxu0 0.0
    %1755 = vmatprep.subr.mxu0 0.0
    %1756 = vmatpush1.msra.mxu0 0.0
    %1757 = vmatprep.subr.mxu0 0.0
    %1758 = vmatpush1.msra.mxu0 0.0
    %1759 = vmatprep.subr.mxu0 0.0
    %1760 = vmatpush1.msra.mxu0 0.0
    %1761 = vmatprep.subr.mxu0 0.0
    %1762 = vmatpush1.msra.mxu0 0.0
    %1763 = vmatprep.subr.mxu0 0.0
    %1764 = vmatpush1.msra.mxu0 0.0
    %1765 = vmatprep.mubr.f32.mxu0 0.0
    %1766 = vmatmul.mubr.f32.gmra.mrb[0].mxu0 %v1685
    %v1767 = vpop.f32.mrb[0].mxu0
    %v1768 = vadd.f32 0.0, %v1767
    %v1769 = vpop.f32.mrb[0].mxu0
    %v1770 = vadd.f32 0.0, %v1769
    %1771 = vdwg.mxu0
    %1772 = vmatprep.subr.mxu0 0.0
    %1773 = vmatpush1.msra.mxu0 %v392
    %1774 = vmatprep.subr.mxu0 0.0
    %1775 = vmatpush1.msra.mxu0 %v395
    %1776 = vmatprep.subr.mxu0 0.0
    %1777 = vmatpush1.msra.mxu0 %v398
    %1778 = vmatprep.subr.mxu0 0.0
    %1779 = vmatpush1.msra.mxu0 %v401
    %1780 = vmatprep.subr.mxu0 0.0
    %1781 = vmatpush1.msra.mxu0 %v404
    %1782 = vmatprep.subr.mxu0 0.0
    %1783 = vmatpush1.msra.mxu0 %v407
    %1784 = vmatprep.subr.mxu0 0.0
    %1785 = vmatpush1.msra.mxu0 %v410
    %1786 = vmatprep.subr.mxu0 0.0
    %1787 = vmatpush1.msra.mxu0 %v413
    %1788 = vmatprep.subr.mxu0 0.0
    %1789 = vmatpush1.msra.mxu0 %v416
    %1790 = vmatprep.subr.mxu0 0.0
    %1791 = vmatpush1.msra.mxu0 %v419
    %1792 = vmatprep.subr.mxu0 0.0
    %1793 = vmatpush1.msra.mxu0 %v422
    %1794 = vmatprep.subr.mxu0 0.0
    %1795 = vmatpush1.msra.mxu0 %v425
    %1796 = vmatprep.subr.mxu0 0.0
    %1797 = vmatpush1.msra.mxu0 %v428
    %1798 = vmatprep.subr.mxu0 0.0
    %1799 = vmatpush1.msra.mxu0 %v431
    %1800 = vmatprep.subr.mxu0 0.0
    %1801 = vmatpush1.msra.mxu0 %v434
    %1802 = vmatprep.subr.mxu0 0.0
    %1803 = vmatpush1.msra.mxu0 %v437
    %1804 = vmatprep.subr.mxu0 0.0
    %1805 = vmatpush1.msra.mxu0 0.0
    %1806 = vmatprep.subr.mxu0 0.0
    %1807 = vmatpush1.msra.mxu0 0.0
    %1808 = vmatprep.subr.mxu0 0.0
    %1809 = vmatpush1.msra.mxu0 0.0
    %1810 = vmatprep.subr.mxu0 0.0
    %1811 = vmatpush1.msra.mxu0 0.0
    %1812 = vmatprep.subr.mxu0 0.0
    %1813 = vmatpush1.msra.mxu0 0.0
    %1814 = vmatprep.subr.mxu0 0.0
    %1815 = vmatpush1.msra.mxu0 0.0
    %1816 = vmatprep.subr.mxu0 0.0
    %1817 = vmatpush1.msra.mxu0 0.0
    %1818 = vmatprep.subr.mxu0 0.0
    %1819 = vmatpush1.msra.mxu0 0.0
    %1820 = vmatprep.subr.mxu0 0.0
    %1821 = vmatpush1.msra.mxu0 0.0
    %1822 = vmatprep.subr.mxu0 0.0
    %1823 = vmatpush1.msra.mxu0 0.0
    %1824 = vmatprep.subr.mxu0 0.0
    %1825 = vmatpush1.msra.mxu0 0.0
    %1826 = vmatprep.subr.mxu0 0.0
    %1827 = vmatpush1.msra.mxu0 0.0
    %1828 = vmatprep.subr.mxu0 0.0
    %1829 = vmatpush1.msra.mxu0 0.0
    %1830 = vmatprep.subr.mxu0 0.0
    %1831 = vmatpush1.msra.mxu0 0.0
    %1832 = vmatprep.subr.mxu0 0.0
    %1833 = vmatpush1.msra.mxu0 0.0
    %1834 = vmatprep.subr.mxu0 0.0
    %1835 = vmatpush1.msra.mxu0 0.0
    %1836 = vmatprep.mubr.f32.mxu0 0.0
    %1837 = vmatmul.mubr.f32.gmra.mrb[0].mxu0 %v1685
    %v1838 = vpop.f32.mrb[0].mxu0
    %v1839 = vadd.f32 0.0, %v1838
    %v1840 = vpop.f32.mrb[0].mxu0
    %1841 = vdwg.mxu0
    %v1842 = vadd.f32 %v1698, %v1768
    %v1843 = vxor.u32 %v1842, 2147483648
    %v1844 = vmul.f32 %v1843, 1.442695
    %v1845 = vpow.pop %v1844
    %v1846 = vadd.f32 %v1845, 1.0
    %v1847 = vrcp.pop %v1846
    %v1848 = vmul.f32 1.0, %v1847
    %v1849 = vadd.f32 %v1699, %v1770
    %v1850 = vxor.u32 %v1849, 2147483648
    %v1851 = vmul.f32 %v1850, 1.442695
    %v1852 = vpow.pop %v1851
    %v1853 = vadd.f32 %v1852, 1.0
    %v1854 = vrcp.pop %v1853
    %v1855 = vmul.f32 1.0, %v1854
    %v1856 = vadd.f32 %v1839, %v608
    %v1857 = vmul.f32 %v1848, %v1856
    %v1858 = vadd.f32 %v1700, %v1857
    %v1859 = vtanh.pop %v1858
    %v1860 = vsub.f32 1.0, %v1855
    %v1861 = vmul.f32 %v1860, %v1859
    %v1862 = vmul.f32 %v1855, %v1685
    %v1863 = vadd.f32 %v1861, %v1862
    %s1864 = sadd.s32 %s440, 8
    %v1865 = vstv %s1864
    %vm1866 = vcmp.eq.s32.totalorder %v439, %v1865
    %v1867 = vsel %vm1866, 1, 0
    %1868 = vset.pattern.permute.xlu0 0
    %1869 = vperm.xlu0 %1868, %v1867
    %v1870 = vpop.permute.xlu0 %1869
    %vm1871 = vcmp.eq.s32.totalorder %v1870, 1
    %v1872 = vsel %vm1871, %v1863, %v1694
    %1873 = vst [vmem:[#allocation3] sm:$0xff] %v1863
    %1874 = vst [vmem:[#allocation4] sm:$0xff] %v1872
    // Predicated region
    $region46: #{tpu_custom_call.1} parent=1 // pred_check
      %p1875 = pneg %p80
    $region47: #{tpu_custom_call.1} parent=1 // pred_check_branch
      %1877 = sbr.rel (%p1875) target = $region49
    $region48: #{tpu_custom_call.1} parent=1 // pred_region
      %v1878 = vld [vmem:[#allocation8] sm:$0xff]
      %v1879 = vld [vmem:[#allocation8 + $0x8] sm:$0xff]
      %v1880 = vld [vmem:[#allocation8 + $0x10] sm:$0xff]
      %v1881 = vld [vmem:[#allocation8 + $0x18] sm:$0xff]
      %v1882 = vld [vmem:[#allocation8 + $0x20] sm:$0xff]
      %v1883 = vld [vmem:[#allocation8 + $0x28] sm:$0xff]
      %v1884 = vld [vmem:[#allocation8 + $0x30] sm:$0xff]
      %v1885 = vld [vmem:[#allocation8 + $0x38] sm:$0xff]
      %v1886 = vld [vmem:[#allocation8 + $0x40] sm:$0xff]
      %v1887 = vld [vmem:[#allocation8 + $0x48] sm:$0xff]
      %v1888 = vld [vmem:[#allocation8 + $0x50] sm:$0xff]
      %v1889 = vld [vmem:[#allocation8 + $0x58] sm:$0xff]
      %v1890 = vld [vmem:[#allocation8 + $0x60] sm:$0xff]
      %v1891 = vld [vmem:[#allocation8 + $0x68] sm:$0xff]
      %v1892 = vld [vmem:[#allocation8 + $0x70] sm:$0xff]
      %v1893 = vld [vmem:[#allocation8 + $0x78] sm:$0xff]
      %v1894 = vld [vmem:[%s7] sm:$0x1]
      %v1896 = vlaneseq
      %v1897 = vshrl.u32 %v1896, 7
      %v1898 = vsub.s32 0, %v1897
      %v1899 = vrot.slane %v1894, %v1898
      %1901 = vmatprep.subr.mxu0 0.0
      %1902 = vmatpush1.msra.mxu0 %v1878
      %1903 = vmatprep.subr.mxu0 0.0
      %1904 = vmatpush1.msra.mxu0 %v1879
      %1905 = vmatprep.subr.mxu0 0.0
      %1906 = vmatpush1.msra.mxu0 %v1880
      %1907 = vmatprep.subr.mxu0 0.0
      %1908 = vmatpush1.msra.mxu0 %v1881
      %1909 = vmatprep.subr.mxu0 0.0
      %1910 = vmatpush1.msra.mxu0 %v1882
      %1911 = vmatprep.subr.mxu0 0.0
      %1912 = vmatpush1.msra.mxu0 %v1883
      %1913 = vmatprep.subr.mxu0 0.0
      %1914 = vmatpush1.msra.mxu0 %v1884
      %1915 = vmatprep.subr.mxu0 0.0
      %1916 = vmatpush1.msra.mxu0 %v1885
      %1917 = vmatprep.subr.mxu0 0.0
      %1918 = vmatpush1.msra.mxu0 %v1886
      %1919 = vmatprep.subr.mxu0 0.0
      %1920 = vmatpush1.msra.mxu0 %v1887
      %1921 = vmatprep.subr.mxu0 0.0
      %1922 = vmatpush1.msra.mxu0 %v1888
      %1923 = vmatprep.subr.mxu0 0.0
      %1924 = vmatpush1.msra.mxu0 %v1889
      %1925 = vmatprep.subr.mxu0 0.0
      %1926 = vmatpush1.msra.mxu0 %v1890
      %1927 = vmatprep.subr.mxu0 0.0
      %1928 = vmatpush1.msra.mxu0 %v1891
      %1929 = vmatprep.subr.mxu0 0.0
      %1930 = vmatpush1.msra.mxu0 %v1892
      %1931 = vmatprep.subr.mxu0 0.0
      %1932 = vmatpush1.msra.mxu0 %v1893
      %1933 = vmatprep.subr.mxu0 0.0
      %1934 = vmatpush1.msra.mxu0 0.0
      %1935 = vmatprep.subr.mxu0 0.0
      %1936 = vmatpush1.msra.mxu0 0.0
      %1937 = vmatprep.subr.mxu0 0.0
      %1938 = vmatpush1.msra.mxu0 0.0
      %1939 = vmatprep.subr.mxu0 0.0
      %1940 = vmatpush1.msra.mxu0 0.0
      %1941 = vmatprep.subr.mxu0 0.0
      %1942 = vmatpush1.msra.mxu0 0.0
      %1943 = vmatprep.subr.mxu0 0.0
      %1944 = vmatpush1.msra.mxu0 0.0
      %1945 = vmatprep.subr.mxu0 0.0
      %1946 = vmatpush1.msra.mxu0 0.0
      %1947 = vmatprep.subr.mxu0 0.0
      %1948 = vmatpush1.msra.mxu0 0.0
      %1949 = vmatprep.subr.mxu0 0.0
      %1950 = vmatpush1.msra.mxu0 0.0
      %1951 = vmatprep.subr.mxu0 0.0
      %1952 = vmatpush1.msra.mxu0 0.0
      %1953 = vmatprep.subr.mxu0 0.0
      %1954 = vmatpush1.msra.mxu0 0.0
      %1955 = vmatprep.subr.mxu0 0.0
      %1956 = vmatpush1.msra.mxu0 0.0
      %1957 = vmatprep.subr.mxu0 0.0
      %1958 = vmatpush1.msra.mxu0 0.0
      %1959 = vmatprep.subr.mxu0 0.0
      %1960 = vmatpush1.msra.mxu0 0.0
      %1961 = vmatprep.subr.mxu0 0.0
      %1962 = vmatpush1.msra.mxu0 0.0
      %1963 = vmatprep.subr.mxu0 0.0
      %1964 = vmatpush1.msra.mxu0 0.0
      %1965 = vmatprep.mubr.f32.mxu0 0.0
      %1966 = vmatmul.mubr.f32.gmra.mrb[0].mxu0 %v1872
      %v1967 = vpop.f32.mrb[0].mxu0
      %v1968 = vadd.f32 %v1899, %v1967
      %v1969 = vpop.f32.mrb[0].mxu0
      %1970 = vdwg.mxu0
      %1971 = vst [vmem:[#allocation10] sm:$0xff] %v1968
    $region49: #{tpu_custom_call.1} parent=1 // pred_fallthru
      _
    // Predicated region
    $region50: #{tpu_custom_call.1} parent=1 // pred_check
      _
    $region51: #{tpu_custom_call.1} parent=1 // pred_check_branch
      %1973 = sbr.rel (0) target = $region53
    $region52: #{tpu_custom_call.1} parent=1 // pred_region
      %s1975 = ssub.s32 128, 128
      %1976 = vsyncadd [#allocation7], %s1975
      %s1978 = sshll.u32 [#allocation10], 4
      %s1979 = int_to_ptr.vmem [resolvable:$true] %s1978
      %1981 = dma.vmem_to_hbm [thread:$0]  %s1979, 128, %s8, [#allocation7]
    $region53: #{tpu_custom_call.1} parent=1 // pred_fallthru
      _
    // Predicated region
    $region54: #{tpu_custom_call.1} parent=1 // pred_check
      _
    $region55: #{tpu_custom_call.1} parent=1 // pred_check_branch
      %1983 = sbr.rel (0) target = $region57
    $region56: #{tpu_custom_call.1} parent=1 // pred_region
      %1984 = dma.done [#allocation7], 128
    $region57: #{tpu_custom_call.1} parent=1 // pred_fallthru
      _
    %1985 = vsyncpa [#allocation6], 1
    %1986 = vsyncpa [#allocation9], 1
    %1987 = vsyncpa [#allocation7], 1

</llo_original>
